<compile_context>
chip_gen: v7x
topology: tpu7x:2x2x1
jax: 0.10.0
libtpu: 0.0.40
codegen_flags: <defaults>
</compile_context>

<pallas_src>
import functools

import jax
import jax.numpy as jnp
import numpy as np
from jax import lax
from jax.experimental import pallas as pl
from jax.experimental.pallas import tpu as pltpu


# --------------------------------------------------------------------------
# Fused kernel: projection + conv + SiLU + SSM params + scan + output
# --------------------------------------------------------------------------
def fused_mamba_kernel(x_ref, w_xqk_ref, b_qk_ref,
                       conv_w_ref, conv_b_ref,
                       w_bcd_ref, b_dt_ref,
                       a_flat_ref, d_ref, wc_ref, b_out_ref,
                       out_ref,
                       ad_s, bu_s, cg_s,
                       *, B, L, E, N, K, W):
    LB = L * B
    NE = N * E

    # ---- fused input + q/k projection (one MXU matmul for all L*B tokens) --
    qk = jnp.dot(x_ref[...], w_xqk_ref[...],
                 preferred_element_type=jnp.float32) + b_qk_ref[...]
    q = qk[:, :E]
    k = qk[:, E:2 * E]

    # ---- depthwise causal conv over time (rows are l-major: row = l*B + b) -
    cw = conv_w_ref[...]                                       # (K, E)
    kpad = jnp.concatenate(
        [jnp.zeros(((K - 1) * B, E), jnp.float32), k], axis=0)
    conv = conv_b_ref[...]                                     # (1, E) -> bcast
    for j in range(K):                                         # static unroll
        conv = conv + kpad[j * B: j * B + LB, :] * cw[j:j + 1, :]
    u = conv * jax.nn.sigmoid(conv)                            # SiLU

    # ---- merged B / C / dt projection (single MXU matmul) ------------------
    # w_bcd = [repeat(W_B,E) | repeat(W_C,E) | W_dt_in@W_dt_out] -> (E, 2NE+E)
    bcd = jnp.dot(u, w_bcd_ref[...], preferred_element_type=jnp.float32)
    b_rep = bcd[:, :NE]                                        # (LB, NE)
    c_rep = bcd[:, NE:2 * NE]                                  # (LB, NE)
    dt = jax.nn.softplus(bcd[:, 2 * NE:2 * NE + E] + b_dt_ref[...])  # (LB, E)

    # gating folded with out_proj and output_proj: g = silu(q) * (W_out@W_outp)
    g = (q * jax.nn.sigmoid(q)) * wc_ref[...]                  # (LB, E)
    # D*u contribution + output bias -> "virtual state" channel value
    du = jnp.sum(d_ref[...] * u * g, axis=-1, keepdims=True) + b_out_ref[...]

    # ---- lane-dense scan tables, flat state layout idx = n*E + e -----------
    dt_t = jnp.concatenate([dt] * N, axis=1)                   # (LB, NE)
    dtu_t = jnp.concatenate([dt * u] * N, axis=1)              # (LB, NE)
    g_t = jnp.concatenate([g] * N, axis=1)                     # (LB, NE)

    ad = jnp.exp(a_flat_ref[...] * dt_t)                       # one big EUP exp
    bu = b_rep * dtu_t
    cg = c_rep * g_t

    pad = W - NE                                               # padded lanes
    lane0 = (lax.broadcasted_iota(jnp.int32, (1, pad), 1) == 0
             ).astype(jnp.float32)                             # (1, pad) const
    zpad = jnp.zeros((LB, pad), jnp.float32)
    ad_s[...] = jnp.concatenate([ad, zpad], axis=1)            # extra chan: 0
    bu_s[...] = jnp.concatenate([bu, du * lane0], axis=1)      # extra chan: du
    cg_s[...] = jnp.concatenate([cg, zpad + lane0], axis=1)    # extra chan: 1

    # ---- fully unrolled selective scan over the L time steps ---------------
    lane_ids = lax.broadcasted_iota(jnp.int32, (1, L), 1)
    st = jnp.zeros((B, W), jnp.float32)
    acc = jnp.zeros((B, L), jnp.float32)
    for i in range(L):                                         # static unroll
        r = i * B
        a_i = ad_s[pl.ds(r, B), :]
        b_i = bu_s[pl.ds(r, B), :]
        c_i = cg_s[pl.ds(r, B), :]
        st = a_i * st + b_i                                    # state update
        z = jnp.sum(st * c_i, axis=-1, keepdims=True)          # (B, 1) output
        acc = acc + z * (lane_ids == i).astype(jnp.float32)    # scatter col i

    # single lane-dense store, already in (B, L) orientation, bias pre-folded
    out_ref[...] = acc


# --------------------------------------------------------------------------
# Wrapper
# --------------------------------------------------------------------------
@jax.jit
def mamba_hourly_forward(x, kp):
    """x: (B, L, in_features) float32, kp: prepared params -> (B, L) float32."""
    B, L, F = x.shape
    E = kp["d"].shape[1]
    N = kp["a_flat"].shape[1] // E
    K = kp["conv_w"].shape[0]
    W = 128                                   # padded scan-table width
    assert N * E + 1 <= W

    # time-major flat token table: row = l*B + b
    x_t = jnp.transpose(x, (1, 0, 2)).reshape(L * B, F).astype(jnp.float32)

    vmem = pl.BlockSpec(memory_space=pltpu.MemorySpace.VMEM)
    args = (x_t, kp["w_xqk"], kp["b_qk"], kp["conv_w"], kp["conv_b"],
            kp["w_bcd"], kp["b_dt"], kp["a_flat"], kp["d"], kp["wc"],
            kp["b_outp"])

    return pl.pallas_call(
        functools.partial(fused_mamba_kernel, B=B, L=L, E=E, N=N, K=K, W=W),
        out_shape=jax.ShapeDtypeStruct((B, L), jnp.float32),
        in_specs=[vmem] * len(args),
        out_specs=vmem,
        scratch_shapes=[
            pltpu.VMEM((L * B, W), jnp.float32),   # A_discrete table (+0 chan)
            pltpu.VMEM((L * B, W), jnp.float32),   # B_discrete*u    (+du chan)
            pltpu.VMEM((L * B, W), jnp.float32),   # C*gate          (+1 chan)
        ],
    )(*args)


# --------------------------------------------------------------------------
# Parameters: raw init (PyTorch-module shapes) + offline kernel-ready fusion
# --------------------------------------------------------------------------
def init_params(key, cfg, in_features):
    Hm = cfg["hidden_size"]
    E = Hm * cfg["expansion_factor"]
    N = cfg["state_size"]
    R = cfg["dt_rank"]
    K = cfg["conv_kernel_size"]
    ks = jax.random.split(key, 15)
    s = 0.1
    p = {
        "w_in":     jax.random.normal(ks[0],  (in_features, Hm)) * s,
        "b_in":     jax.random.normal(ks[1],  (1, Hm)) * s,
        "w_q":      jax.random.normal(ks[2],  (Hm, E)) * s,
        "w_k":      jax.random.normal(ks[3],  (Hm, E)) * s,
        "conv_w":   jax.random.normal(ks[4],  (K, E)) * s,     # depthwise taps
        "conv_b":   jax.random.normal(ks[5],  (1, E)) * s,
        "w_dt_in":  jax.random.normal(ks[6],  (E, R)) * s,
        "w_dt_out": jax.random.normal(ks[7],  (R, E)) * s,
        "b_dt_out": jax.random.normal(ks[8],  (1, E)) * s,
        "w_B":      jax.random.normal(ks[9],  (E, N)) * s,
        "w_C":      jax.random.normal(ks[10], (E, N)) * s,
        "d":        jax.random.normal(ks[11], (1, E)) * s,
        "a_log":    jnp.log(jnp.tile(
            jnp.arange(1, N + 1, dtype=jnp.float32)[None, :], (E, 1))),
        "w_out":    jax.random.normal(ks[12], (E, Hm)) * s,
        "w_outp":   jax.random.normal(ks[13], (Hm, 1)) * s,
        "b_outp":   jax.random.normal(ks[14], (1, 1)) * s,
    }
    return jax.tree.map(lambda a: a.astype(jnp.float32), p)


def prepare_params(p):
    """One-time (outside jit) weight fusion for the kernel."""
    E = p["w_q"].shape[1]
    N = p["w_B"].shape[1]
    w_qk = jnp.concatenate([p["w_q"], p["w_k"]], axis=1)              # (Hm, 2E)
    w_dt = p["w_dt_in"] @ p["w_dt_out"]                               # (E, E)
    w_b_rep = jnp.repeat(p["w_B"], E, axis=1)                         # (E, N*E)
    w_c_rep = jnp.repeat(p["w_C"], E, axis=1)                         # (E, N*E)
    a_t = (-jnp.exp(p["a_log"])).T                                    # (N, E)
    return {
        "w_xqk":  p["w_in"] @ w_qk,                                   # (F, 2E)
        "b_qk":   p["b_in"] @ w_qk,                                   # (1, 2E)
        "conv_w": p["conv_w"],
        "conv_b": p["conv_b"],
        "w_bcd":  jnp.concatenate([w_b_rep, w_c_rep, w_dt], axis=1),  # (E,2NE+E)
        "b_dt":   p["b_dt_out"],
        "a_flat": a_t.reshape(1, N * E),                              # (1, N*E)
        "d":      p["d"],                                             # (1, E)
        "wc":     (p["w_out"] @ p["w_outp"]).T,                       # (1, E)
        "b_outp": p["b_outp"],                                        # (1, 1)
    }


# --------------------------------------------------------------------------
# Pure-JAX reference (mirrors the PyTorch forward exactly, raw params)
# --------------------------------------------------------------------------
def reference_forward(x, params):
    Bsz, L, _ = x.shape
    K = params["conv_w"].shape[0]

    h = x @ params["w_in"] + params["b_in"][0]
    q = h @ params["w_q"]
    k = h @ params["w_k"]

    k_pad = jnp.pad(k, ((0, 0), (K - 1, 0), (0, 0)))
    conv = sum(k_pad[:, j:j + L, :] * params["conv_w"][j][None, None, :]
               for j in range(K)) + params["conv_b"][0]
    u = jax.nn.silu(conv)

    dt = jax.nn.softplus(u @ params["w_dt_in"] @ params["w_dt_out"]
                         + params["b_dt_out"][0])
    Bm = u @ params["w_B"]
    Cm = u @ params["w_C"]
    A = -jnp.exp(params["a_log"])                       # (E, N)

    def step(state, inp):
        dt_i, b_i, c_i, u_i = inp
        A_d = jnp.exp(A[None] * dt_i[:, :, None])
        B_d = b_i[:, None, :] * dt_i[:, :, None]
        state = A_d * state + B_d * u_i[:, :, None]
        y = jnp.einsum("bn,bhn->bh", c_i, state) + params["d"][0] * u_i
        return state, y

    E = params["w_q"].shape[1]
    N = params["w_B"].shape[1]
    state0 = jnp.zeros((Bsz, E, N), jnp.float32)
    _, ys = jax.lax.scan(step, state0,
                         (dt.transpose(1, 0, 2), Bm.transpose(1, 0, 2),
                          Cm.transpose(1, 0, 2), u.transpose(1, 0, 2)))
    ssm = ys.transpose(1, 0, 2)

    o = (ssm * jax.nn.silu(q)) @ params["w_out"]
    out = o @ params["w_outp"] + params["b_outp"][0]
    return out[..., 0]


if __name__ == "__main__":
    cfg = dict(state_size=4, hidden_size=8, expansion_factor=2,
               dt_rank=4, conv_kernel_size=4)
    in_features = 15
    B, L = 2, 24                                       # 24-step hourly series

    key = jax.random.PRNGKey(0)
    kx, kw = jax.random.split(key)
    x = jax.random.normal(kx, (B, L, in_features), dtype=jnp.float32)
    params = init_params(kw, cfg, in_features)
    kparams = prepare_params(params)                   # offline weight fusion

    out = mamba_hourly_forward(x, kparams)
    out = jax.block_until_ready(out)
    assert out.shape == (B, L)

    ref = reference_forward(x, params)
    np.testing.assert_allclose(np.asarray(out), np.asarray(ref),
                               atol=2e-3, rtol=2e-3)
    print("KERNEL_OK")
</pallas_src>

<mosaic_0001>
module attributes {stable_mosaic.version = 11 : i64} {
  func.func @fused_mamba_kernel(%arg0: memref<48x15xf32, #tpu.memory_space<vmem>>, %arg1: memref<15x32xf32, #tpu.memory_space<vmem>>, %arg2: memref<1x32xf32, #tpu.memory_space<vmem>>, %arg3: memref<4x16xf32, #tpu.memory_space<vmem>>, %arg4: memref<1x16xf32, #tpu.memory_space<vmem>>, %arg5: memref<16x144xf32, #tpu.memory_space<vmem>>, %arg6: memref<1x16xf32, #tpu.memory_space<vmem>>, %arg7: memref<1x64xf32, #tpu.memory_space<vmem>>, %arg8: memref<1x16xf32, #tpu.memory_space<vmem>>, %arg9: memref<1x16xf32, #tpu.memory_space<vmem>>, %arg10: memref<1x1xf32, #tpu.memory_space<vmem>>, %arg11: memref<2x24xf32, #tpu.memory_space<vmem>>, %arg12: memref<48x128xf32, #tpu.memory_space<vmem>>, %arg13: memref<48x128xf32, #tpu.memory_space<vmem>>, %arg14: memref<48x128xf32, #tpu.memory_space<vmem>>) attributes {dimension_semantics = [], scalar_prefetch = 0 : i64, scratch_operands = 3 : i64, tpu.core_type = #tpu.core_type<tc>} {
    %c0 = arith.constant 0 : index
    %c0_0 = arith.constant 0 : index
    %0 = vector.load %arg0[%c0, %c0_0] : memref<48x15xf32, #tpu.memory_space<vmem>>, vector<48x15xf32>
    %c0_1 = arith.constant 0 : index
    %c0_2 = arith.constant 0 : index
    %1 = vector.load %arg1[%c0_1, %c0_2] : memref<15x32xf32, #tpu.memory_space<vmem>>, vector<15x32xf32>
    %cst = arith.constant dense<0.000000e+00> : vector<48x32xf32>
    %2 = tpu.matmul %0, %1, %cst {dimension_numbers = #tpu.dot_dimension_numbers<[1], [0], [0], [1], [0, 0, 1, 1], [], []>} : vector<48x15xf32>, vector<15x32xf32>, vector<48x32xf32> -> vector<48x32xf32>
    %c0_3 = arith.constant 0 : index
    %c0_4 = arith.constant 0 : index
    %3 = vector.load %arg2[%c0_3, %c0_4] : memref<1x32xf32, #tpu.memory_space<vmem>>, vector<1x32xf32>
    %4 = vector.broadcast %3 : vector<1x32xf32> to vector<48x32xf32>
    %5 = arith.addf %2, %4 : vector<48x32xf32>
    %6 = vector.extract_strided_slice %5 {offsets = [0, 0], sizes = [48, 16], strides = [1, 1]} : vector<48x32xf32> to vector<48x16xf32>
    %7 = vector.extract_strided_slice %5 {offsets = [0, 16], sizes = [48, 16], strides = [1, 1]} : vector<48x32xf32> to vector<48x16xf32>
    %c0_5 = arith.constant 0 : index
    %c0_6 = arith.constant 0 : index
    %8 = vector.load %arg3[%c0_5, %c0_6] : memref<4x16xf32, #tpu.memory_space<vmem>>, vector<4x16xf32>
    %cst_7 = arith.constant 0.000000e+00 : f32
    %9 = vector.broadcast %cst_7 : f32 to vector<6x16xf32>
    %10 = tpu.concatenate %9, %7 in 0 : vector<6x16xf32>, vector<48x16xf32> -> vector<54x16xf32>
    %c0_8 = arith.constant 0 : index
    %c0_9 = arith.constant 0 : index
    %11 = vector.load %arg4[%c0_8, %c0_9] : memref<1x16xf32, #tpu.memory_space<vmem>>, vector<1x16xf32>
    %12 = vector.extract_strided_slice %10 {offsets = [0, 0], sizes = [48, 16], strides = [1, 1]} : vector<54x16xf32> to vector<48x16xf32>
    %13 = vector.extract_strided_slice %8 {offsets = [0, 0], sizes = [1, 16], strides = [1, 1]} : vector<4x16xf32> to vector<1x16xf32>
    %14 = vector.broadcast %13 : vector<1x16xf32> to vector<48x16xf32>
    %15 = arith.mulf %12, %14 : vector<48x16xf32>
    %16 = vector.broadcast %11 : vector<1x16xf32> to vector<48x16xf32>
    %17 = arith.addf %16, %15 : vector<48x16xf32>
    %18 = vector.extract_strided_slice %10 {offsets = [2, 0], sizes = [48, 16], strides = [1, 1]} : vector<54x16xf32> to vector<48x16xf32>
    %19 = vector.extract_strided_slice %8 {offsets = [1, 0], sizes = [1, 16], strides = [1, 1]} : vector<4x16xf32> to vector<1x16xf32>
    %20 = vector.broadcast %19 : vector<1x16xf32> to vector<48x16xf32>
    %21 = arith.mulf %18, %20 : vector<48x16xf32>
    %22 = arith.addf %17, %21 : vector<48x16xf32>
    %23 = vector.extract_strided_slice %10 {offsets = [4, 0], sizes = [48, 16], strides = [1, 1]} : vector<54x16xf32> to vector<48x16xf32>
    %24 = vector.extract_strided_slice %8 {offsets = [2, 0], sizes = [1, 16], strides = [1, 1]} : vector<4x16xf32> to vector<1x16xf32>
    %25 = vector.broadcast %24 : vector<1x16xf32> to vector<48x16xf32>
    %26 = arith.mulf %23, %25 : vector<48x16xf32>
    %27 = arith.addf %22, %26 : vector<48x16xf32>
    %28 = vector.extract_strided_slice %10 {offsets = [6, 0], sizes = [48, 16], strides = [1, 1]} : vector<54x16xf32> to vector<48x16xf32>
    %29 = vector.extract_strided_slice %8 {offsets = [3, 0], sizes = [1, 16], strides = [1, 1]} : vector<4x16xf32> to vector<1x16xf32>
    %30 = vector.broadcast %29 : vector<1x16xf32> to vector<48x16xf32>
    %31 = arith.mulf %28, %30 : vector<48x16xf32>
    %32 = arith.addf %27, %31 : vector<48x16xf32>
    %33 = arith.negf %32 : vector<48x16xf32>
    %34 = math.exp %33 : vector<48x16xf32>
    %cst_10 = arith.constant 1.000000e+00 : f32
    %35 = vector.broadcast %cst_10 : f32 to vector<48x16xf32>
    %36 = arith.addf %35, %34 : vector<48x16xf32>
    %37 = arith.divf %35, %36 : vector<48x16xf32>
    %38 = arith.mulf %32, %37 : vector<48x16xf32>
    %c0_11 = arith.constant 0 : index
    %c0_12 = arith.constant 0 : index
    %39 = vector.load %arg5[%c0_11, %c0_12] : memref<16x144xf32, #tpu.memory_space<vmem>>, vector<16x144xf32>
    %cst_13 = arith.constant dense<0.000000e+00> : vector<48x144xf32>
    %40 = tpu.matmul %38, %39, %cst_13 {dimension_numbers = #tpu.dot_dimension_numbers<[1], [0], [0], [1], [0, 0, 1, 1], [], []>} : vector<48x16xf32>, vector<16x144xf32>, vector<48x144xf32> -> vector<48x144xf32>
    %41 = vector.extract_strided_slice %40 {offsets = [0, 0], sizes = [48, 64], strides = [1, 1]} : vector<48x144xf32> to vector<48x64xf32>
    %42 = vector.extract_strided_slice %40 {offsets = [0, 64], sizes = [48, 64], strides = [1, 1]} : vector<48x144xf32> to vector<48x64xf32>
    %43 = vector.extract_strided_slice %40 {offsets = [0, 128], sizes = [48, 16], strides = [1, 1]} : vector<48x144xf32> to vector<48x16xf32>
    %c0_14 = arith.constant 0 : index
    %c0_15 = arith.constant 0 : index
    %44 = vector.load %arg6[%c0_14, %c0_15] : memref<1x16xf32, #tpu.memory_space<vmem>>, vector<1x16xf32>
    %45 = vector.broadcast %44 : vector<1x16xf32> to vector<48x16xf32>
    %46 = arith.addf %43, %45 : vector<48x16xf32>
    %cst_16 = arith.constant 0.000000e+00 : f32
    %47 = vector.broadcast %cst_16 : f32 to vector<48x16xf32>
    %48 = arith.maximumf %46, %47 : vector<48x16xf32>
    %49 = vector.broadcast %cst_16 : f32 to vector<48x16xf32>
    %50 = arith.subf %46, %49 : vector<48x16xf32>
    %51 = arith.cmpf one, %50, %50 : vector<48x16xf32>
    %52 = vector.broadcast %cst_16 : f32 to vector<48x16xf32>
    %53 = arith.addf %46, %52 : vector<48x16xf32>
    %54 = math.absf %50 : vector<48x16xf32>
    %cst_17 = arith.constant 0.000000e+00 : f32
    %55 = vector.broadcast %cst_17 : f32 to vector<48x16xf32>
    %56 = arith.subf %55, %54 : vector<48x16xf32>
    %57 = math.exp %56 : vector<48x16xf32>
    %58 = math.log1p %57 : vector<48x16xf32>
    %59 = arith.addf %48, %58 : vector<48x16xf32>
    %60 = arith.select %51, %53, %59 : vector<48x16xi1>, vector<48x16xf32>
    %61 = arith.negf %6 : vector<48x16xf32>
    %62 = math.exp %61 : vector<48x16xf32>
    %cst_18 = arith.constant 1.000000e+00 : f32
    %63 = vector.broadcast %cst_18 : f32 to vector<48x16xf32>
    %64 = arith.addf %63, %62 : vector<48x16xf32>
    %65 = arith.divf %63, %64 : vector<48x16xf32>
    %66 = arith.mulf %6, %65 : vector<48x16xf32>
    %c0_19 = arith.constant 0 : index
    %c0_20 = arith.constant 0 : index
    %67 = vector.load %arg9[%c0_19, %c0_20] : memref<1x16xf32, #tpu.memory_space<vmem>>, vector<1x16xf32>
    %68 = vector.broadcast %67 : vector<1x16xf32> to vector<48x16xf32>
    %69 = arith.mulf %66, %68 : vector<48x16xf32>
    %c0_21 = arith.constant 0 : index
    %c0_22 = arith.constant 0 : index
    %70 = vector.load %arg8[%c0_21, %c0_22] : memref<1x16xf32, #tpu.memory_space<vmem>>, vector<1x16xf32>
    %71 = vector.broadcast %70 : vector<1x16xf32> to vector<48x16xf32>
    %72 = arith.mulf %71, %38 : vector<48x16xf32>
    %73 = arith.mulf %72, %69 : vector<48x16xf32>
    %cst_23 = arith.constant dense<0.000000e+00> : vector<48xf32>
    %74 = vector.multi_reduction <add>, %73, %cst_23 [1] : vector<48x16xf32> to vector<48xf32>
    %75 = vector.shape_cast %74 : vector<48xf32> to vector<48x1xf32>
    %c0_24 = arith.constant 0 : index
    %c0_25 = arith.constant 0 : index
    %76 = vector.load %arg10[%c0_24, %c0_25] : memref<1x1xf32, #tpu.memory_space<vmem>>, vector<1x1xf32>
    %77 = vector.broadcast %76 : vector<1x1xf32> to vector<48x1xf32>
    %78 = arith.addf %75, %77 : vector<48x1xf32>
    %79 = tpu.concatenate %60, %60, %60, %60 in 1 : vector<48x16xf32>, vector<48x16xf32>, vector<48x16xf32>, vector<48x16xf32> -> vector<48x64xf32>
    %80 = arith.mulf %60, %38 : vector<48x16xf32>
    %81 = tpu.concatenate %80, %80, %80, %80 in 1 : vector<48x16xf32>, vector<48x16xf32>, vector<48x16xf32>, vector<48x16xf32> -> vector<48x64xf32>
    %82 = tpu.concatenate %69, %69, %69, %69 in 1 : vector<48x16xf32>, vector<48x16xf32>, vector<48x16xf32>, vector<48x16xf32> -> vector<48x64xf32>
    %c0_26 = arith.constant 0 : index
    %c0_27 = arith.constant 0 : index
    %83 = vector.load %arg7[%c0_26, %c0_27] : memref<1x64xf32, #tpu.memory_space<vmem>>, vector<1x64xf32>
    %84 = vector.broadcast %83 : vector<1x64xf32> to vector<48x64xf32>
    %85 = arith.mulf %84, %79 : vector<48x64xf32>
    %86 = math.exp %85 : vector<48x64xf32>
    %87 = arith.mulf %41, %81 : vector<48x64xf32>
    %88 = arith.mulf %42, %82 : vector<48x64xf32>
    %89 = tpu.iota {dimensions = array<i32: 1>} : vector<1x64xi32>
    %c0_i32 = arith.constant 0 : i32
    %90 = vector.broadcast %c0_i32 : i32 to vector<1x64xi32>
    %91 = arith.cmpi eq, %89, %90 : vector<1x64xi32>
    %92 = arith.extui %91 : vector<1x64xi1> to vector<1x64xi32>
    %93 = arith.sitofp %92 : vector<1x64xi32> to vector<1x64xf32>
    %cst_28 = arith.constant 0.000000e+00 : f32
    %94 = vector.broadcast %cst_28 : f32 to vector<48x64xf32>
    %95 = tpu.concatenate %86, %94 in 1 : vector<48x64xf32>, vector<48x64xf32> -> vector<48x128xf32>
    %c0_29 = arith.constant 0 : index
    %c0_30 = arith.constant 0 : index
    %96 = vector.load %arg12[%c0_29, %c0_30] : memref<48x128xf32, #tpu.memory_space<vmem>>, vector<48x128xf32>
    tpu.vector_store %arg12[%c0_29, %c0_30], %95 {strides = array<i32>} : memref<48x128xf32, #tpu.memory_space<vmem>>, vector<48x128xf32>,
    %97 = vector.broadcast %78 : vector<48x1xf32> to vector<48x64xf32>
    %98 = vector.broadcast %93 : vector<1x64xf32> to vector<48x64xf32>
    %99 = arith.mulf %97, %98 : vector<48x64xf32>
    %100 = tpu.concatenate %87, %99 in 1 : vector<48x64xf32>, vector<48x64xf32> -> vector<48x128xf32>
    %c0_31 = arith.constant 0 : index
    %c0_32 = arith.constant 0 : index
    %101 = vector.load %arg13[%c0_31, %c0_32] : memref<48x128xf32, #tpu.memory_space<vmem>>, vector<48x128xf32>
    tpu.vector_store %arg13[%c0_31, %c0_32], %100 {strides = array<i32>} : memref<48x128xf32, #tpu.memory_space<vmem>>, vector<48x128xf32>,
    %102 = vector.broadcast %93 : vector<1x64xf32> to vector<48x64xf32>
    %103 = arith.addf %94, %102 : vector<48x64xf32>
    %104 = tpu.concatenate %88, %103 in 1 : vector<48x64xf32>, vector<48x64xf32> -> vector<48x128xf32>
    %c0_33 = arith.constant 0 : index
    %c0_34 = arith.constant 0 : index
    %105 = vector.load %arg14[%c0_33, %c0_34] : memref<48x128xf32, #tpu.memory_space<vmem>>, vector<48x128xf32>
    tpu.vector_store %arg14[%c0_33, %c0_34], %104 {strides = array<i32>} : memref<48x128xf32, #tpu.memory_space<vmem>>, vector<48x128xf32>,
    %106 = tpu.iota {dimensions = array<i32: 1>} : vector<1x24xi32>
    %cst_35 = arith.constant 0.000000e+00 : f32
    %107 = vector.broadcast %cst_35 : f32 to vector<2x128xf32>
    %cst_36 = arith.constant 0.000000e+00 : f32
    %108 = vector.broadcast %cst_36 : f32 to vector<2x24xf32>
    %c0_37 = arith.constant 0 : index
    %c0_38 = arith.constant 0 : index
    %109 = vector.load %arg12[%c0_37, %c0_38] : memref<48x128xf32, #tpu.memory_space<vmem>>, vector<2x128xf32>
    %c0_39 = arith.constant 0 : index
    %c0_40 = arith.constant 0 : index
    %110 = vector.load %arg13[%c0_39, %c0_40] : memref<48x128xf32, #tpu.memory_space<vmem>>, vector<2x128xf32>
    %c0_41 = arith.constant 0 : index
    %c0_42 = arith.constant 0 : index
    %111 = vector.load %arg14[%c0_41, %c0_42] : memref<48x128xf32, #tpu.memory_space<vmem>>, vector<2x128xf32>
    %112 = arith.mulf %109, %107 : vector<2x128xf32>
    %113 = arith.addf %112, %110 : vector<2x128xf32>
    %114 = arith.mulf %113, %111 : vector<2x128xf32>
    %cst_43 = arith.constant dense<0.000000e+00> : vector<2xf32>
    %115 = vector.multi_reduction <add>, %114, %cst_43 [1] : vector<2x128xf32> to vector<2xf32>
    %116 = vector.shape_cast %115 : vector<2xf32> to vector<2x1xf32>
    %c0_i32_44 = arith.constant 0 : i32
    %117 = vector.broadcast %c0_i32_44 : i32 to vector<1x24xi32>
    %118 = arith.cmpi eq, %106, %117 : vector<1x24xi32>
    %119 = arith.extui %118 : vector<1x24xi1> to vector<1x24xi32>
    %120 = arith.sitofp %119 : vector<1x24xi32> to vector<1x24xf32>
    %121 = vector.broadcast %116 : vector<2x1xf32> to vector<2x24xf32>
    %122 = vector.broadcast %120 : vector<1x24xf32> to vector<2x24xf32>
    %123 = arith.mulf %121, %122 : vector<2x24xf32>
    %124 = arith.addf %108, %123 : vector<2x24xf32>
    %c2 = arith.constant 2 : index
    %c0_45 = arith.constant 0 : index
    %125 = vector.load %arg12[%c2, %c0_45] : memref<48x128xf32, #tpu.memory_space<vmem>>, vector<2x128xf32>
    %c2_46 = arith.constant 2 : index
    %c0_47 = arith.constant 0 : index
    %126 = vector.load %arg13[%c2_46, %c0_47] : memref<48x128xf32, #tpu.memory_space<vmem>>, vector<2x128xf32>
    %c2_48 = arith.constant 2 : index
    %c0_49 = arith.constant 0 : index
    %127 = vector.load %arg14[%c2_48, %c0_49] : memref<48x128xf32, #tpu.memory_space<vmem>>, vector<2x128xf32>
    %128 = arith.mulf %125, %113 : vector<2x128xf32>
    %129 = arith.addf %128, %126 : vector<2x128xf32>
    %130 = arith.mulf %129, %127 : vector<2x128xf32>
    %cst_50 = arith.constant dense<0.000000e+00> : vector<2xf32>
    %131 = vector.multi_reduction <add>, %130, %cst_50 [1] : vector<2x128xf32> to vector<2xf32>
    %132 = vector.shape_cast %131 : vector<2xf32> to vector<2x1xf32>
    %c1_i32 = arith.constant 1 : i32
    %133 = vector.broadcast %c1_i32 : i32 to vector<1x24xi32>
    %134 = arith.cmpi eq, %106, %133 : vector<1x24xi32>
    %135 = arith.extui %134 : vector<1x24xi1> to vector<1x24xi32>
    %136 = arith.sitofp %135 : vector<1x24xi32> to vector<1x24xf32>
    %137 = vector.broadcast %132 : vector<2x1xf32> to vector<2x24xf32>
    %138 = vector.broadcast %136 : vector<1x24xf32> to vector<2x24xf32>
    %139 = arith.mulf %137, %138 : vector<2x24xf32>
    %140 = arith.addf %124, %139 : vector<2x24xf32>
    %c4 = arith.constant 4 : index
    %c0_51 = arith.constant 0 : index
    %141 = vector.load %arg12[%c4, %c0_51] : memref<48x128xf32, #tpu.memory_space<vmem>>, vector<2x128xf32>
    %c4_52 = arith.constant 4 : index
    %c0_53 = arith.constant 0 : index
    %142 = vector.load %arg13[%c4_52, %c0_53] : memref<48x128xf32, #tpu.memory_space<vmem>>, vector<2x128xf32>
    %c4_54 = arith.constant 4 : index
    %c0_55 = arith.constant 0 : index
    %143 = vector.load %arg14[%c4_54, %c0_55] : memref<48x128xf32, #tpu.memory_space<vmem>>, vector<2x128xf32>
    %144 = arith.mulf %141, %129 : vector<2x128xf32>
    %145 = arith.addf %144, %142 : vector<2x128xf32>
    %146 = arith.mulf %145, %143 : vector<2x128xf32>
    %cst_56 = arith.constant dense<0.000000e+00> : vector<2xf32>
    %147 = vector.multi_reduction <add>, %146, %cst_56 [1] : vector<2x128xf32> to vector<2xf32>
    %148 = vector.shape_cast %147 : vector<2xf32> to vector<2x1xf32>
    %c2_i32 = arith.constant 2 : i32
    %149 = vector.broadcast %c2_i32 : i32 to vector<1x24xi32>
    %150 = arith.cmpi eq, %106, %149 : vector<1x24xi32>
    %151 = arith.extui %150 : vector<1x24xi1> to vector<1x24xi32>
    %152 = arith.sitofp %151 : vector<1x24xi32> to vector<1x24xf32>
    %153 = vector.broadcast %148 : vector<2x1xf32> to vector<2x24xf32>
    %154 = vector.broadcast %152 : vector<1x24xf32> to vector<2x24xf32>
    %155 = arith.mulf %153, %154 : vector<2x24xf32>
    %156 = arith.addf %140, %155 : vector<2x24xf32>
    %c6 = arith.constant 6 : index
    %c0_57 = arith.constant 0 : index
    %157 = vector.load %arg12[%c6, %c0_57] : memref<48x128xf32, #tpu.memory_space<vmem>>, vector<2x128xf32>
    %c6_58 = arith.constant 6 : index
    %c0_59 = arith.constant 0 : index
    %158 = vector.load %arg13[%c6_58, %c0_59] : memref<48x128xf32, #tpu.memory_space<vmem>>, vector<2x128xf32>
    %c6_60 = arith.constant 6 : index
    %c0_61 = arith.constant 0 : index
    %159 = vector.load %arg14[%c6_60, %c0_61] : memref<48x128xf32, #tpu.memory_space<vmem>>, vector<2x128xf32>
    %160 = arith.mulf %157, %145 : vector<2x128xf32>
    %161 = arith.addf %160, %158 : vector<2x128xf32>
    %162 = arith.mulf %161, %159 : vector<2x128xf32>
    %cst_62 = arith.constant dense<0.000000e+00> : vector<2xf32>
    %163 = vector.multi_reduction <add>, %162, %cst_62 [1] : vector<2x128xf32> to vector<2xf32>
    %164 = vector.shape_cast %163 : vector<2xf32> to vector<2x1xf32>
    %c3_i32 = arith.constant 3 : i32
    %165 = vector.broadcast %c3_i32 : i32 to vector<1x24xi32>
    %166 = arith.cmpi eq, %106, %165 : vector<1x24xi32>
    %167 = arith.extui %166 : vector<1x24xi1> to vector<1x24xi32>
    %168 = arith.sitofp %167 : vector<1x24xi32> to vector<1x24xf32>
    %169 = vector.broadcast %164 : vector<2x1xf32> to vector<2x24xf32>
    %170 = vector.broadcast %168 : vector<1x24xf32> to vector<2x24xf32>
    %171 = arith.mulf %169, %170 : vector<2x24xf32>
    %172 = arith.addf %156, %171 : vector<2x24xf32>
    %c8 = arith.constant 8 : index
    %c0_63 = arith.constant 0 : index
    %173 = vector.load %arg12[%c8, %c0_63] : memref<48x128xf32, #tpu.memory_space<vmem>>, vector<2x128xf32>
    %c8_64 = arith.constant 8 : index
    %c0_65 = arith.constant 0 : index
    %174 = vector.load %arg13[%c8_64, %c0_65] : memref<48x128xf32, #tpu.memory_space<vmem>>, vector<2x128xf32>
    %c8_66 = arith.constant 8 : index
    %c0_67 = arith.constant 0 : index
    %175 = vector.load %arg14[%c8_66, %c0_67] : memref<48x128xf32, #tpu.memory_space<vmem>>, vector<2x128xf32>
    %176 = arith.mulf %173, %161 : vector<2x128xf32>
    %177 = arith.addf %176, %174 : vector<2x128xf32>
    %178 = arith.mulf %177, %175 : vector<2x128xf32>
    %cst_68 = arith.constant dense<0.000000e+00> : vector<2xf32>
    %179 = vector.multi_reduction <add>, %178, %cst_68 [1] : vector<2x128xf32> to vector<2xf32>
    %180 = vector.shape_cast %179 : vector<2xf32> to vector<2x1xf32>
    %c4_i32 = arith.constant 4 : i32
    %181 = vector.broadcast %c4_i32 : i32 to vector<1x24xi32>
    %182 = arith.cmpi eq, %106, %181 : vector<1x24xi32>
    %183 = arith.extui %182 : vector<1x24xi1> to vector<1x24xi32>
    %184 = arith.sitofp %183 : vector<1x24xi32> to vector<1x24xf32>
    %185 = vector.broadcast %180 : vector<2x1xf32> to vector<2x24xf32>
    %186 = vector.broadcast %184 : vector<1x24xf32> to vector<2x24xf32>
    %187 = arith.mulf %185, %186 : vector<2x24xf32>
    %188 = arith.addf %172, %187 : vector<2x24xf32>
    %c10 = arith.constant 10 : index
    %c0_69 = arith.constant 0 : index
    %189 = vector.load %arg12[%c10, %c0_69] : memref<48x128xf32, #tpu.memory_space<vmem>>, vector<2x128xf32>
    %c10_70 = arith.constant 10 : index
    %c0_71 = arith.constant 0 : index
    %190 = vector.load %arg13[%c10_70, %c0_71] : memref<48x128xf32, #tpu.memory_space<vmem>>, vector<2x128xf32>
    %c10_72 = arith.constant 10 : index
    %c0_73 = arith.constant 0 : index
    %191 = vector.load %arg14[%c10_72, %c0_73] : memref<48x128xf32, #tpu.memory_space<vmem>>, vector<2x128xf32>
    %192 = arith.mulf %189, %177 : vector<2x128xf32>
    %193 = arith.addf %192, %190 : vector<2x128xf32>
    %194 = arith.mulf %193, %191 : vector<2x128xf32>
    %cst_74 = arith.constant dense<0.000000e+00> : vector<2xf32>
    %195 = vector.multi_reduction <add>, %194, %cst_74 [1] : vector<2x128xf32> to vector<2xf32>
    %196 = vector.shape_cast %195 : vector<2xf32> to vector<2x1xf32>
    %c5_i32 = arith.constant 5 : i32
    %197 = vector.broadcast %c5_i32 : i32 to vector<1x24xi32>
    %198 = arith.cmpi eq, %106, %197 : vector<1x24xi32>
    %199 = arith.extui %198 : vector<1x24xi1> to vector<1x24xi32>
    %200 = arith.sitofp %199 : vector<1x24xi32> to vector<1x24xf32>
    %201 = vector.broadcast %196 : vector<2x1xf32> to vector<2x24xf32>
    %202 = vector.broadcast %200 : vector<1x24xf32> to vector<2x24xf32>
    %203 = arith.mulf %201, %202 : vector<2x24xf32>
    %204 = arith.addf %188, %203 : vector<2x24xf32>
    %c12 = arith.constant 12 : index
    %c0_75 = arith.constant 0 : index
    %205 = vector.load %arg12[%c12, %c0_75] : memref<48x128xf32, #tpu.memory_space<vmem>>, vector<2x128xf32>
    %c12_76 = arith.constant 12 : index
    %c0_77 = arith.constant 0 : index
    %206 = vector.load %arg13[%c12_76, %c0_77] : memref<48x128xf32, #tpu.memory_space<vmem>>, vector<2x128xf32>
    %c12_78 = arith.constant 12 : index
    %c0_79 = arith.constant 0 : index
    %207 = vector.load %arg14[%c12_78, %c0_79] : memref<48x128xf32, #tpu.memory_space<vmem>>, vector<2x128xf32>
    %208 = arith.mulf %205, %193 : vector<2x128xf32>
    %209 = arith.addf %208, %206 : vector<2x128xf32>
    %210 = arith.mulf %209, %207 : vector<2x128xf32>
    %cst_80 = arith.constant dense<0.000000e+00> : vector<2xf32>
    %211 = vector.multi_reduction <add>, %210, %cst_80 [1] : vector<2x128xf32> to vector<2xf32>
    %212 = vector.shape_cast %211 : vector<2xf32> to vector<2x1xf32>
    %c6_i32 = arith.constant 6 : i32
    %213 = vector.broadcast %c6_i32 : i32 to vector<1x24xi32>
    %214 = arith.cmpi eq, %106, %213 : vector<1x24xi32>
    %215 = arith.extui %214 : vector<1x24xi1> to vector<1x24xi32>
    %216 = arith.sitofp %215 : vector<1x24xi32> to vector<1x24xf32>
    %217 = vector.broadcast %212 : vector<2x1xf32> to vector<2x24xf32>
    %218 = vector.broadcast %216 : vector<1x24xf32> to vector<2x24xf32>
    %219 = arith.mulf %217, %218 : vector<2x24xf32>
    %220 = arith.addf %204, %219 : vector<2x24xf32>
    %c14 = arith.constant 14 : index
    %c0_81 = arith.constant 0 : index
    %221 = vector.load %arg12[%c14, %c0_81] : memref<48x128xf32, #tpu.memory_space<vmem>>, vector<2x128xf32>
    %c14_82 = arith.constant 14 : index
    %c0_83 = arith.constant 0 : index
    %222 = vector.load %arg13[%c14_82, %c0_83] : memref<48x128xf32, #tpu.memory_space<vmem>>, vector<2x128xf32>
    %c14_84 = arith.constant 14 : index
    %c0_85 = arith.constant 0 : index
    %223 = vector.load %arg14[%c14_84, %c0_85] : memref<48x128xf32, #tpu.memory_space<vmem>>, vector<2x128xf32>
    %224 = arith.mulf %221, %209 : vector<2x128xf32>
    %225 = arith.addf %224, %222 : vector<2x128xf32>
    %226 = arith.mulf %225, %223 : vector<2x128xf32>
    %cst_86 = arith.constant dense<0.000000e+00> : vector<2xf32>
    %227 = vector.multi_reduction <add>, %226, %cst_86 [1] : vector<2x128xf32> to vector<2xf32>
    %228 = vector.shape_cast %227 : vector<2xf32> to vector<2x1xf32>
    %c7_i32 = arith.constant 7 : i32
    %229 = vector.broadcast %c7_i32 : i32 to vector<1x24xi32>
    %230 = arith.cmpi eq, %106, %229 : vector<1x24xi32>
    %231 = arith.extui %230 : vector<1x24xi1> to vector<1x24xi32>
    %232 = arith.sitofp %231 : vector<1x24xi32> to vector<1x24xf32>
    %233 = vector.broadcast %228 : vector<2x1xf32> to vector<2x24xf32>
    %234 = vector.broadcast %232 : vector<1x24xf32> to vector<2x24xf32>
    %235 = arith.mulf %233, %234 : vector<2x24xf32>
    %236 = arith.addf %220, %235 : vector<2x24xf32>
    %c16 = arith.constant 16 : index
    %c0_87 = arith.constant 0 : index
    %237 = vector.load %arg12[%c16, %c0_87] : memref<48x128xf32, #tpu.memory_space<vmem>>, vector<2x128xf32>
    %c16_88 = arith.constant 16 : index
    %c0_89 = arith.constant 0 : index
    %238 = vector.load %arg13[%c16_88, %c0_89] : memref<48x128xf32, #tpu.memory_space<vmem>>, vector<2x128xf32>
    %c16_90 = arith.constant 16 : index
    %c0_91 = arith.constant 0 : index
    %239 = vector.load %arg14[%c16_90, %c0_91] : memref<48x128xf32, #tpu.memory_space<vmem>>, vector<2x128xf32>
    %240 = arith.mulf %237, %225 : vector<2x128xf32>
    %241 = arith.addf %240, %238 : vector<2x128xf32>
    %242 = arith.mulf %241, %239 : vector<2x128xf32>
    %cst_92 = arith.constant dense<0.000000e+00> : vector<2xf32>
    %243 = vector.multi_reduction <add>, %242, %cst_92 [1] : vector<2x128xf32> to vector<2xf32>
    %244 = vector.shape_cast %243 : vector<2xf32> to vector<2x1xf32>
    %c8_i32 = arith.constant 8 : i32
    %245 = vector.broadcast %c8_i32 : i32 to vector<1x24xi32>
    %246 = arith.cmpi eq, %106, %245 : vector<1x24xi32>
    %247 = arith.extui %246 : vector<1x24xi1> to vector<1x24xi32>
    %248 = arith.sitofp %247 : vector<1x24xi32> to vector<1x24xf32>
    %249 = vector.broadcast %244 : vector<2x1xf32> to vector<2x24xf32>
    %250 = vector.broadcast %248 : vector<1x24xf32> to vector<2x24xf32>
    %251 = arith.mulf %249, %250 : vector<2x24xf32>
    %252 = arith.addf %236, %251 : vector<2x24xf32>
    %c18 = arith.constant 18 : index
    %c0_93 = arith.constant 0 : index
    %253 = vector.load %arg12[%c18, %c0_93] : memref<48x128xf32, #tpu.memory_space<vmem>>, vector<2x128xf32>
    %c18_94 = arith.constant 18 : index
    %c0_95 = arith.constant 0 : index
    %254 = vector.load %arg13[%c18_94, %c0_95] : memref<48x128xf32, #tpu.memory_space<vmem>>, vector<2x128xf32>
    %c18_96 = arith.constant 18 : index
    %c0_97 = arith.constant 0 : index
    %255 = vector.load %arg14[%c18_96, %c0_97] : memref<48x128xf32, #tpu.memory_space<vmem>>, vector<2x128xf32>
    %256 = arith.mulf %253, %241 : vector<2x128xf32>
    %257 = arith.addf %256, %254 : vector<2x128xf32>
    %258 = arith.mulf %257, %255 : vector<2x128xf32>
    %cst_98 = arith.constant dense<0.000000e+00> : vector<2xf32>
    %259 = vector.multi_reduction <add>, %258, %cst_98 [1] : vector<2x128xf32> to vector<2xf32>
    %260 = vector.shape_cast %259 : vector<2xf32> to vector<2x1xf32>
    %c9_i32 = arith.constant 9 : i32
    %261 = vector.broadcast %c9_i32 : i32 to vector<1x24xi32>
    %262 = arith.cmpi eq, %106, %261 : vector<1x24xi32>
    %263 = arith.extui %262 : vector<1x24xi1> to vector<1x24xi32>
    %264 = arith.sitofp %263 : vector<1x24xi32> to vector<1x24xf32>
    %265 = vector.broadcast %260 : vector<2x1xf32> to vector<2x24xf32>
    %266 = vector.broadcast %264 : vector<1x24xf32> to vector<2x24xf32>
    %267 = arith.mulf %265, %266 : vector<2x24xf32>
    %268 = arith.addf %252, %267 : vector<2x24xf32>
    %c20 = arith.constant 20 : index
    %c0_99 = arith.constant 0 : index
    %269 = vector.load %arg12[%c20, %c0_99] : memref<48x128xf32, #tpu.memory_space<vmem>>, vector<2x128xf32>
    %c20_100 = arith.constant 20 : index
    %c0_101 = arith.constant 0 : index
    %270 = vector.load %arg13[%c20_100, %c0_101] : memref<48x128xf32, #tpu.memory_space<vmem>>, vector<2x128xf32>
    %c20_102 = arith.constant 20 : index
    %c0_103 = arith.constant 0 : index
    %271 = vector.load %arg14[%c20_102, %c0_103] : memref<48x128xf32, #tpu.memory_space<vmem>>, vector<2x128xf32>
    %272 = arith.mulf %269, %257 : vector<2x128xf32>
    %273 = arith.addf %272, %270 : vector<2x128xf32>
    %274 = arith.mulf %273, %271 : vector<2x128xf32>
    %cst_104 = arith.constant dense<0.000000e+00> : vector<2xf32>
    %275 = vector.multi_reduction <add>, %274, %cst_104 [1] : vector<2x128xf32> to vector<2xf32>
    %276 = vector.shape_cast %275 : vector<2xf32> to vector<2x1xf32>
    %c10_i32 = arith.constant 10 : i32
    %277 = vector.broadcast %c10_i32 : i32 to vector<1x24xi32>
    %278 = arith.cmpi eq, %106, %277 : vector<1x24xi32>
    %279 = arith.extui %278 : vector<1x24xi1> to vector<1x24xi32>
    %280 = arith.sitofp %279 : vector<1x24xi32> to vector<1x24xf32>
    %281 = vector.broadcast %276 : vector<2x1xf32> to vector<2x24xf32>
    %282 = vector.broadcast %280 : vector<1x24xf32> to vector<2x24xf32>
    %283 = arith.mulf %281, %282 : vector<2x24xf32>
    %284 = arith.addf %268, %283 : vector<2x24xf32>
    %c22 = arith.constant 22 : index
    %c0_105 = arith.constant 0 : index
    %285 = vector.load %arg12[%c22, %c0_105] : memref<48x128xf32, #tpu.memory_space<vmem>>, vector<2x128xf32>
    %c22_106 = arith.constant 22 : index
    %c0_107 = arith.constant 0 : index
    %286 = vector.load %arg13[%c22_106, %c0_107] : memref<48x128xf32, #tpu.memory_space<vmem>>, vector<2x128xf32>
    %c22_108 = arith.constant 22 : index
    %c0_109 = arith.constant 0 : index
    %287 = vector.load %arg14[%c22_108, %c0_109] : memref<48x128xf32, #tpu.memory_space<vmem>>, vector<2x128xf32>
    %288 = arith.mulf %285, %273 : vector<2x128xf32>
    %289 = arith.addf %288, %286 : vector<2x128xf32>
    %290 = arith.mulf %289, %287 : vector<2x128xf32>
    %cst_110 = arith.constant dense<0.000000e+00> : vector<2xf32>
    %291 = vector.multi_reduction <add>, %290, %cst_110 [1] : vector<2x128xf32> to vector<2xf32>
    %292 = vector.shape_cast %291 : vector<2xf32> to vector<2x1xf32>
    %c11_i32 = arith.constant 11 : i32
    %293 = vector.broadcast %c11_i32 : i32 to vector<1x24xi32>
    %294 = arith.cmpi eq, %106, %293 : vector<1x24xi32>
    %295 = arith.extui %294 : vector<1x24xi1> to vector<1x24xi32>
    %296 = arith.sitofp %295 : vector<1x24xi32> to vector<1x24xf32>
    %297 = vector.broadcast %292 : vector<2x1xf32> to vector<2x24xf32>
    %298 = vector.broadcast %296 : vector<1x24xf32> to vector<2x24xf32>
    %299 = arith.mulf %297, %298 : vector<2x24xf32>
    %300 = arith.addf %284, %299 : vector<2x24xf32>
    %c24 = arith.constant 24 : index
    %c0_111 = arith.constant 0 : index
    %301 = vector.load %arg12[%c24, %c0_111] : memref<48x128xf32, #tpu.memory_space<vmem>>, vector<2x128xf32>
    %c24_112 = arith.constant 24 : index
    %c0_113 = arith.constant 0 : index
    %302 = vector.load %arg13[%c24_112, %c0_113] : memref<48x128xf32, #tpu.memory_space<vmem>>, vector<2x128xf32>
    %c24_114 = arith.constant 24 : index
    %c0_115 = arith.constant 0 : index
    %303 = vector.load %arg14[%c24_114, %c0_115] : memref<48x128xf32, #tpu.memory_space<vmem>>, vector<2x128xf32>
    %304 = arith.mulf %301, %289 : vector<2x128xf32>
    %305 = arith.addf %304, %302 : vector<2x128xf32>
    %306 = arith.mulf %305, %303 : vector<2x128xf32>
    %cst_116 = arith.constant dense<0.000000e+00> : vector<2xf32>
    %307 = vector.multi_reduction <add>, %306, %cst_116 [1] : vector<2x128xf32> to vector<2xf32>
    %308 = vector.shape_cast %307 : vector<2xf32> to vector<2x1xf32>
    %c12_i32 = arith.constant 12 : i32
    %309 = vector.broadcast %c12_i32 : i32 to vector<1x24xi32>
    %310 = arith.cmpi eq, %106, %309 : vector<1x24xi32>
    %311 = arith.extui %310 : vector<1x24xi1> to vector<1x24xi32>
    %312 = arith.sitofp %311 : vector<1x24xi32> to vector<1x24xf32>
    %313 = vector.broadcast %308 : vector<2x1xf32> to vector<2x24xf32>
    %314 = vector.broadcast %312 : vector<1x24xf32> to vector<2x24xf32>
    %315 = arith.mulf %313, %314 : vector<2x24xf32>
    %316 = arith.addf %300, %315 : vector<2x24xf32>
    %c26 = arith.constant 26 : index
    %c0_117 = arith.constant 0 : index
    %317 = vector.load %arg12[%c26, %c0_117] : memref<48x128xf32, #tpu.memory_space<vmem>>, vector<2x128xf32>
    %c26_118 = arith.constant 26 : index
    %c0_119 = arith.constant 0 : index
    %318 = vector.load %arg13[%c26_118, %c0_119] : memref<48x128xf32, #tpu.memory_space<vmem>>, vector<2x128xf32>
    %c26_120 = arith.constant 26 : index
    %c0_121 = arith.constant 0 : index
    %319 = vector.load %arg14[%c26_120, %c0_121] : memref<48x128xf32, #tpu.memory_space<vmem>>, vector<2x128xf32>
    %320 = arith.mulf %317, %305 : vector<2x128xf32>
    %321 = arith.addf %320, %318 : vector<2x128xf32>
    %322 = arith.mulf %321, %319 : vector<2x128xf32>
    %cst_122 = arith.constant dense<0.000000e+00> : vector<2xf32>
    %323 = vector.multi_reduction <add>, %322, %cst_122 [1] : vector<2x128xf32> to vector<2xf32>
    %324 = vector.shape_cast %323 : vector<2xf32> to vector<2x1xf32>
    %c13_i32 = arith.constant 13 : i32
    %325 = vector.broadcast %c13_i32 : i32 to vector<1x24xi32>
    %326 = arith.cmpi eq, %106, %325 : vector<1x24xi32>
    %327 = arith.extui %326 : vector<1x24xi1> to vector<1x24xi32>
    %328 = arith.sitofp %327 : vector<1x24xi32> to vector<1x24xf32>
    %329 = vector.broadcast %324 : vector<2x1xf32> to vector<2x24xf32>
    %330 = vector.broadcast %328 : vector<1x24xf32> to vector<2x24xf32>
    %331 = arith.mulf %329, %330 : vector<2x24xf32>
    %332 = arith.addf %316, %331 : vector<2x24xf32>
    %c28 = arith.constant 28 : index
    %c0_123 = arith.constant 0 : index
    %333 = vector.load %arg12[%c28, %c0_123] : memref<48x128xf32, #tpu.memory_space<vmem>>, vector<2x128xf32>
    %c28_124 = arith.constant 28 : index
    %c0_125 = arith.constant 0 : index
    %334 = vector.load %arg13[%c28_124, %c0_125] : memref<48x128xf32, #tpu.memory_space<vmem>>, vector<2x128xf32>
    %c28_126 = arith.constant 28 : index
    %c0_127 = arith.constant 0 : index
    %335 = vector.load %arg14[%c28_126, %c0_127] : memref<48x128xf32, #tpu.memory_space<vmem>>, vector<2x128xf32>
    %336 = arith.mulf %333, %321 : vector<2x128xf32>
    %337 = arith.addf %336, %334 : vector<2x128xf32>
    %338 = arith.mulf %337, %335 : vector<2x128xf32>
    %cst_128 = arith.constant dense<0.000000e+00> : vector<2xf32>
    %339 = vector.multi_reduction <add>, %338, %cst_128 [1] : vector<2x128xf32> to vector<2xf32>
    %340 = vector.shape_cast %339 : vector<2xf32> to vector<2x1xf32>
    %c14_i32 = arith.constant 14 : i32
    %341 = vector.broadcast %c14_i32 : i32 to vector<1x24xi32>
    %342 = arith.cmpi eq, %106, %341 : vector<1x24xi32>
    %343 = arith.extui %342 : vector<1x24xi1> to vector<1x24xi32>
    %344 = arith.sitofp %343 : vector<1x24xi32> to vector<1x24xf32>
    %345 = vector.broadcast %340 : vector<2x1xf32> to vector<2x24xf32>
    %346 = vector.broadcast %344 : vector<1x24xf32> to vector<2x24xf32>
    %347 = arith.mulf %345, %346 : vector<2x24xf32>
    %348 = arith.addf %332, %347 : vector<2x24xf32>
    %c30 = arith.constant 30 : index
    %c0_129 = arith.constant 0 : index
    %349 = vector.load %arg12[%c30, %c0_129] : memref<48x128xf32, #tpu.memory_space<vmem>>, vector<2x128xf32>
    %c30_130 = arith.constant 30 : index
    %c0_131 = arith.constant 0 : index
    %350 = vector.load %arg13[%c30_130, %c0_131] : memref<48x128xf32, #tpu.memory_space<vmem>>, vector<2x128xf32>
    %c30_132 = arith.constant 30 : index
    %c0_133 = arith.constant 0 : index
    %351 = vector.load %arg14[%c30_132, %c0_133] : memref<48x128xf32, #tpu.memory_space<vmem>>, vector<2x128xf32>
    %352 = arith.mulf %349, %337 : vector<2x128xf32>
    %353 = arith.addf %352, %350 : vector<2x128xf32>
    %354 = arith.mulf %353, %351 : vector<2x128xf32>
    %cst_134 = arith.constant dense<0.000000e+00> : vector<2xf32>
    %355 = vector.multi_reduction <add>, %354, %cst_134 [1] : vector<2x128xf32> to vector<2xf32>
    %356 = vector.shape_cast %355 : vector<2xf32> to vector<2x1xf32>
    %c15_i32 = arith.constant 15 : i32
    %357 = vector.broadcast %c15_i32 : i32 to vector<1x24xi32>
    %358 = arith.cmpi eq, %106, %357 : vector<1x24xi32>
    %359 = arith.extui %358 : vector<1x24xi1> to vector<1x24xi32>
    %360 = arith.sitofp %359 : vector<1x24xi32> to vector<1x24xf32>
    %361 = vector.broadcast %356 : vector<2x1xf32> to vector<2x24xf32>
    %362 = vector.broadcast %360 : vector<1x24xf32> to vector<2x24xf32>
    %363 = arith.mulf %361, %362 : vector<2x24xf32>
    %364 = arith.addf %348, %363 : vector<2x24xf32>
    %c32 = arith.constant 32 : index
    %c0_135 = arith.constant 0 : index
    %365 = vector.load %arg12[%c32, %c0_135] : memref<48x128xf32, #tpu.memory_space<vmem>>, vector<2x128xf32>
    %c32_136 = arith.constant 32 : index
    %c0_137 = arith.constant 0 : index
    %366 = vector.load %arg13[%c32_136, %c0_137] : memref<48x128xf32, #tpu.memory_space<vmem>>, vector<2x128xf32>
    %c32_138 = arith.constant 32 : index
    %c0_139 = arith.constant 0 : index
    %367 = vector.load %arg14[%c32_138, %c0_139] : memref<48x128xf32, #tpu.memory_space<vmem>>, vector<2x128xf32>
    %368 = arith.mulf %365, %353 : vector<2x128xf32>
    %369 = arith.addf %368, %366 : vector<2x128xf32>
    %370 = arith.mulf %369, %367 : vector<2x128xf32>
    %cst_140 = arith.constant dense<0.000000e+00> : vector<2xf32>
    %371 = vector.multi_reduction <add>, %370, %cst_140 [1] : vector<2x128xf32> to vector<2xf32>
    %372 = vector.shape_cast %371 : vector<2xf32> to vector<2x1xf32>
    %c16_i32 = arith.constant 16 : i32
    %373 = vector.broadcast %c16_i32 : i32 to vector<1x24xi32>
    %374 = arith.cmpi eq, %106, %373 : vector<1x24xi32>
    %375 = arith.extui %374 : vector<1x24xi1> to vector<1x24xi32>
    %376 = arith.sitofp %375 : vector<1x24xi32> to vector<1x24xf32>
    %377 = vector.broadcast %372 : vector<2x1xf32> to vector<2x24xf32>
    %378 = vector.broadcast %376 : vector<1x24xf32> to vector<2x24xf32>
    %379 = arith.mulf %377, %378 : vector<2x24xf32>
    %380 = arith.addf %364, %379 : vector<2x24xf32>
    %c34 = arith.constant 34 : index
    %c0_141 = arith.constant 0 : index
    %381 = vector.load %arg12[%c34, %c0_141] : memref<48x128xf32, #tpu.memory_space<vmem>>, vector<2x128xf32>
    %c34_142 = arith.constant 34 : index
    %c0_143 = arith.constant 0 : index
    %382 = vector.load %arg13[%c34_142, %c0_143] : memref<48x128xf32, #tpu.memory_space<vmem>>, vector<2x128xf32>
    %c34_144 = arith.constant 34 : index
    %c0_145 = arith.constant 0 : index
    %383 = vector.load %arg14[%c34_144, %c0_145] : memref<48x128xf32, #tpu.memory_space<vmem>>, vector<2x128xf32>
    %384 = arith.mulf %381, %369 : vector<2x128xf32>
    %385 = arith.addf %384, %382 : vector<2x128xf32>
    %386 = arith.mulf %385, %383 : vector<2x128xf32>
    %cst_146 = arith.constant dense<0.000000e+00> : vector<2xf32>
    %387 = vector.multi_reduction <add>, %386, %cst_146 [1] : vector<2x128xf32> to vector<2xf32>
    %388 = vector.shape_cast %387 : vector<2xf32> to vector<2x1xf32>
    %c17_i32 = arith.constant 17 : i32
    %389 = vector.broadcast %c17_i32 : i32 to vector<1x24xi32>
    %390 = arith.cmpi eq, %106, %389 : vector<1x24xi32>
    %391 = arith.extui %390 : vector<1x24xi1> to vector<1x24xi32>
    %392 = arith.sitofp %391 : vector<1x24xi32> to vector<1x24xf32>
    %393 = vector.broadcast %388 : vector<2x1xf32> to vector<2x24xf32>
    %394 = vector.broadcast %392 : vector<1x24xf32> to vector<2x24xf32>
    %395 = arith.mulf %393, %394 : vector<2x24xf32>
    %396 = arith.addf %380, %395 : vector<2x24xf32>
    %c36 = arith.constant 36 : index
    %c0_147 = arith.constant 0 : index
    %397 = vector.load %arg12[%c36, %c0_147] : memref<48x128xf32, #tpu.memory_space<vmem>>, vector<2x128xf32>
    %c36_148 = arith.constant 36 : index
    %c0_149 = arith.constant 0 : index
    %398 = vector.load %arg13[%c36_148, %c0_149] : memref<48x128xf32, #tpu.memory_space<vmem>>, vector<2x128xf32>
    %c36_150 = arith.constant 36 : index
    %c0_151 = arith.constant 0 : index
    %399 = vector.load %arg14[%c36_150, %c0_151] : memref<48x128xf32, #tpu.memory_space<vmem>>, vector<2x128xf32>
    %400 = arith.mulf %397, %385 : vector<2x128xf32>
    %401 = arith.addf %400, %398 : vector<2x128xf32>
    %402 = arith.mulf %401, %399 : vector<2x128xf32>
    %cst_152 = arith.constant dense<0.000000e+00> : vector<2xf32>
    %403 = vector.multi_reduction <add>, %402, %cst_152 [1] : vector<2x128xf32> to vector<2xf32>
    %404 = vector.shape_cast %403 : vector<2xf32> to vector<2x1xf32>
    %c18_i32 = arith.constant 18 : i32
    %405 = vector.broadcast %c18_i32 : i32 to vector<1x24xi32>
    %406 = arith.cmpi eq, %106, %405 : vector<1x24xi32>
    %407 = arith.extui %406 : vector<1x24xi1> to vector<1x24xi32>
    %408 = arith.sitofp %407 : vector<1x24xi32> to vector<1x24xf32>
    %409 = vector.broadcast %404 : vector<2x1xf32> to vector<2x24xf32>
    %410 = vector.broadcast %408 : vector<1x24xf32> to vector<2x24xf32>
    %411 = arith.mulf %409, %410 : vector<2x24xf32>
    %412 = arith.addf %396, %411 : vector<2x24xf32>
    %c38 = arith.constant 38 : index
    %c0_153 = arith.constant 0 : index
    %413 = vector.load %arg12[%c38, %c0_153] : memref<48x128xf32, #tpu.memory_space<vmem>>, vector<2x128xf32>
    %c38_154 = arith.constant 38 : index
    %c0_155 = arith.constant 0 : index
    %414 = vector.load %arg13[%c38_154, %c0_155] : memref<48x128xf32, #tpu.memory_space<vmem>>, vector<2x128xf32>
    %c38_156 = arith.constant 38 : index
    %c0_157 = arith.constant 0 : index
    %415 = vector.load %arg14[%c38_156, %c0_157] : memref<48x128xf32, #tpu.memory_space<vmem>>, vector<2x128xf32>
    %416 = arith.mulf %413, %401 : vector<2x128xf32>
    %417 = arith.addf %416, %414 : vector<2x128xf32>
    %418 = arith.mulf %417, %415 : vector<2x128xf32>
    %cst_158 = arith.constant dense<0.000000e+00> : vector<2xf32>
    %419 = vector.multi_reduction <add>, %418, %cst_158 [1] : vector<2x128xf32> to vector<2xf32>
    %420 = vector.shape_cast %419 : vector<2xf32> to vector<2x1xf32>
    %c19_i32 = arith.constant 19 : i32
    %421 = vector.broadcast %c19_i32 : i32 to vector<1x24xi32>
    %422 = arith.cmpi eq, %106, %421 : vector<1x24xi32>
    %423 = arith.extui %422 : vector<1x24xi1> to vector<1x24xi32>
    %424 = arith.sitofp %423 : vector<1x24xi32> to vector<1x24xf32>
    %425 = vector.broadcast %420 : vector<2x1xf32> to vector<2x24xf32>
    %426 = vector.broadcast %424 : vector<1x24xf32> to vector<2x24xf32>
    %427 = arith.mulf %425, %426 : vector<2x24xf32>
    %428 = arith.addf %412, %427 : vector<2x24xf32>
    %c40 = arith.constant 40 : index
    %c0_159 = arith.constant 0 : index
    %429 = vector.load %arg12[%c40, %c0_159] : memref<48x128xf32, #tpu.memory_space<vmem>>, vector<2x128xf32>
    %c40_160 = arith.constant 40 : index
    %c0_161 = arith.constant 0 : index
    %430 = vector.load %arg13[%c40_160, %c0_161] : memref<48x128xf32, #tpu.memory_space<vmem>>, vector<2x128xf32>
    %c40_162 = arith.constant 40 : index
    %c0_163 = arith.constant 0 : index
    %431 = vector.load %arg14[%c40_162, %c0_163] : memref<48x128xf32, #tpu.memory_space<vmem>>, vector<2x128xf32>
    %432 = arith.mulf %429, %417 : vector<2x128xf32>
    %433 = arith.addf %432, %430 : vector<2x128xf32>
    %434 = arith.mulf %433, %431 : vector<2x128xf32>
    %cst_164 = arith.constant dense<0.000000e+00> : vector<2xf32>
    %435 = vector.multi_reduction <add>, %434, %cst_164 [1] : vector<2x128xf32> to vector<2xf32>
    %436 = vector.shape_cast %435 : vector<2xf32> to vector<2x1xf32>
    %c20_i32 = arith.constant 20 : i32
    %437 = vector.broadcast %c20_i32 : i32 to vector<1x24xi32>
    %438 = arith.cmpi eq, %106, %437 : vector<1x24xi32>
    %439 = arith.extui %438 : vector<1x24xi1> to vector<1x24xi32>
    %440 = arith.sitofp %439 : vector<1x24xi32> to vector<1x24xf32>
    %441 = vector.broadcast %436 : vector<2x1xf32> to vector<2x24xf32>
    %442 = vector.broadcast %440 : vector<1x24xf32> to vector<2x24xf32>
    %443 = arith.mulf %441, %442 : vector<2x24xf32>
    %444 = arith.addf %428, %443 : vector<2x24xf32>
    %c42 = arith.constant 42 : index
    %c0_165 = arith.constant 0 : index
    %445 = vector.load %arg12[%c42, %c0_165] : memref<48x128xf32, #tpu.memory_space<vmem>>, vector<2x128xf32>
    %c42_166 = arith.constant 42 : index
    %c0_167 = arith.constant 0 : index
    %446 = vector.load %arg13[%c42_166, %c0_167] : memref<48x128xf32, #tpu.memory_space<vmem>>, vector<2x128xf32>
    %c42_168 = arith.constant 42 : index
    %c0_169 = arith.constant 0 : index
    %447 = vector.load %arg14[%c42_168, %c0_169] : memref<48x128xf32, #tpu.memory_space<vmem>>, vector<2x128xf32>
    %448 = arith.mulf %445, %433 : vector<2x128xf32>
    %449 = arith.addf %448, %446 : vector<2x128xf32>
    %450 = arith.mulf %449, %447 : vector<2x128xf32>
    %cst_170 = arith.constant dense<0.000000e+00> : vector<2xf32>
    %451 = vector.multi_reduction <add>, %450, %cst_170 [1] : vector<2x128xf32> to vector<2xf32>
    %452 = vector.shape_cast %451 : vector<2xf32> to vector<2x1xf32>
    %c21_i32 = arith.constant 21 : i32
    %453 = vector.broadcast %c21_i32 : i32 to vector<1x24xi32>
    %454 = arith.cmpi eq, %106, %453 : vector<1x24xi32>
    %455 = arith.extui %454 : vector<1x24xi1> to vector<1x24xi32>
    %456 = arith.sitofp %455 : vector<1x24xi32> to vector<1x24xf32>
    %457 = vector.broadcast %452 : vector<2x1xf32> to vector<2x24xf32>
    %458 = vector.broadcast %456 : vector<1x24xf32> to vector<2x24xf32>
    %459 = arith.mulf %457, %458 : vector<2x24xf32>
    %460 = arith.addf %444, %459 : vector<2x24xf32>
    %c44 = arith.constant 44 : index
    %c0_171 = arith.constant 0 : index
    %461 = vector.load %arg12[%c44, %c0_171] : memref<48x128xf32, #tpu.memory_space<vmem>>, vector<2x128xf32>
    %c44_172 = arith.constant 44 : index
    %c0_173 = arith.constant 0 : index
    %462 = vector.load %arg13[%c44_172, %c0_173] : memref<48x128xf32, #tpu.memory_space<vmem>>, vector<2x128xf32>
    %c44_174 = arith.constant 44 : index
    %c0_175 = arith.constant 0 : index
    %463 = vector.load %arg14[%c44_174, %c0_175] : memref<48x128xf32, #tpu.memory_space<vmem>>, vector<2x128xf32>
    %464 = arith.mulf %461, %449 : vector<2x128xf32>
    %465 = arith.addf %464, %462 : vector<2x128xf32>
    %466 = arith.mulf %465, %463 : vector<2x128xf32>
    %cst_176 = arith.constant dense<0.000000e+00> : vector<2xf32>
    %467 = vector.multi_reduction <add>, %466, %cst_176 [1] : vector<2x128xf32> to vector<2xf32>
    %468 = vector.shape_cast %467 : vector<2xf32> to vector<2x1xf32>
    %c22_i32 = arith.constant 22 : i32
    %469 = vector.broadcast %c22_i32 : i32 to vector<1x24xi32>
    %470 = arith.cmpi eq, %106, %469 : vector<1x24xi32>
    %471 = arith.extui %470 : vector<1x24xi1> to vector<1x24xi32>
    %472 = arith.sitofp %471 : vector<1x24xi32> to vector<1x24xf32>
    %473 = vector.broadcast %468 : vector<2x1xf32> to vector<2x24xf32>
    %474 = vector.broadcast %472 : vector<1x24xf32> to vector<2x24xf32>
    %475 = arith.mulf %473, %474 : vector<2x24xf32>
    %476 = arith.addf %460, %475 : vector<2x24xf32>
    %c46 = arith.constant 46 : index
    %c0_177 = arith.constant 0 : index
    %477 = vector.load %arg12[%c46, %c0_177] : memref<48x128xf32, #tpu.memory_space<vmem>>, vector<2x128xf32>
    %c46_178 = arith.constant 46 : index
    %c0_179 = arith.constant 0 : index
    %478 = vector.load %arg13[%c46_178, %c0_179] : memref<48x128xf32, #tpu.memory_space<vmem>>, vector<2x128xf32>
    %c46_180 = arith.constant 46 : index
    %c0_181 = arith.constant 0 : index
    %479 = vector.load %arg14[%c46_180, %c0_181] : memref<48x128xf32, #tpu.memory_space<vmem>>, vector<2x128xf32>
    %480 = arith.mulf %477, %465 : vector<2x128xf32>
    %481 = arith.addf %480, %478 : vector<2x128xf32>
    %482 = arith.mulf %481, %479 : vector<2x128xf32>
    %cst_182 = arith.constant dense<0.000000e+00> : vector<2xf32>
    %483 = vector.multi_reduction <add>, %482, %cst_182 [1] : vector<2x128xf32> to vector<2xf32>
    %484 = vector.shape_cast %483 : vector<2xf32> to vector<2x1xf32>
    %c23_i32 = arith.constant 23 : i32
    %485 = vector.broadcast %c23_i32 : i32 to vector<1x24xi32>
    %486 = arith.cmpi eq, %106, %485 : vector<1x24xi32>
    %487 = arith.extui %486 : vector<1x24xi1> to vector<1x24xi32>
    %488 = arith.sitofp %487 : vector<1x24xi32> to vector<1x24xf32>
    %489 = vector.broadcast %484 : vector<2x1xf32> to vector<2x24xf32>
    %490 = vector.broadcast %488 : vector<1x24xf32> to vector<2x24xf32>
    %491 = arith.mulf %489, %490 : vector<2x24xf32>
    %492 = arith.addf %476, %491 : vector<2x24xf32>
    %c0_183 = arith.constant 0 : index
    %c0_184 = arith.constant 0 : index
    %493 = vector.load %arg11[%c0_183, %c0_184] : memref<2x24xf32, #tpu.memory_space<vmem>>, vector<2x24xf32>
    tpu.vector_store %arg11[%c0_183, %c0_184], %492 {strides = array<i32>} : memref<2x24xf32, #tpu.memory_space<vmem>>, vector<2x24xf32>,
    return
  }
}

</mosaic_0001>

<llo_original>
// kernel: mamba_hourly_forward.1
$region0: #{mamba_hourly_forward.1}
  #allocation0 [shape = 'u32[]', space=smem, size = 0x4, offset = 0x4, fixed_abs, tag = 'smem constant byte address 0x4 - core index']
  #allocation1 [shape = 'u32[144,128]{1,0:T(1,128)}', space=vmem, size = 0x12000, scoped, tag = 'internal scratch']
  #allocation2 [shape = 'f32[48,128]{1,0:T(8,128)}', space=vmem, size = 0x6000, scoped, tag = 'scratch operand']
  #allocation3 [shape = 'f32[48,128]{1,0:T(8,128)}', space=vmem, size = 0x6000, scoped, tag = 'scratch operand']
  #allocation4 [shape = 'f32[48,128]{1,0:T(8,128)}', space=vmem, size = 0x6000, scoped, tag = 'scratch operand']
  #allocation5 [shape = 'f32[1,1]{1,0:T(1,128)S(1)}', space=vmem, size = 0x200, scoped, tag = 'scoped memory for mamba_hourly_forward.1']
  %s0 = inlined_call_operand.vmem [shape: f32[48,15], index: 0, kind: input, shape index: {}]
  %s1 = inlined_call_operand.vmem [shape: f32[15,32], index: 1, kind: input, shape index: {}]
  %s2 = inlined_call_operand.vmem [shape: f32[1,32], index: 2, kind: input, shape index: {}]
  %s3 = inlined_call_operand.vmem [shape: f32[4,16], index: 3, kind: input, shape index: {}]
  %s4 = inlined_call_operand.vmem [shape: f32[1,16], index: 4, kind: input, shape index: {}]
  %s5 = inlined_call_operand.vmem [shape: f32[16,144], index: 5, kind: input, shape index: {}]
  %s6 = inlined_call_operand.vmem [shape: f32[1,16], index: 6, kind: input, shape index: {}]
  %s7 = inlined_call_operand.vmem [shape: f32[1,64], index: 7, kind: input, shape index: {}]
  %s8 = inlined_call_operand.vmem [shape: f32[1,16], index: 8, kind: input, shape index: {}]
  %s9 = inlined_call_operand.vmem [shape: f32[1,16], index: 9, kind: input, shape index: {}]
  %s10 = inlined_call_operand.<no memory space> [shape: f32[1,1], index: 10, kind: input, shape index: {}]
  %s11 = inlined_call_operand.hbm [shape: f32[2,24], index: 11, kind: output, shape index: {}]
  %s12 = sld [smem:[#allocation0]]
  $region54: #{mamba_hourly_forward.1} parent=0
    _
  %s14 = ssub.s32 1, %s12
  %s15 = scalar_select 0, %s14, %s12
  %v16 = vstv %s10
  %17 = vst [vmem:[#allocation5] sm:$0x1] %v16
  $region1: #{mamba_hourly_forward.1} parent=0
    #allocation6 [shape = 'u8[1024]{0}', space=vmem, size = 0x400, scoped, tag = 'output window, operand 0, single buffered']
    #allocation7 [shape = 's32[1]{0}', space=sflag, size = 0x4, scoped, tag = 'scoped memory for mamba_hourly_forward.1']
    %18 = vsyncpa [#allocation7], 0
    // Predicated region
    $region2: #{mamba_hourly_forward.1} parent=1 // pred_check
      _
    $region3: #{mamba_hourly_forward.1} parent=1 // pred_check_branch
      %20 = sbr.rel (0) target = $region5
    $region4: #{mamba_hourly_forward.1} parent=1 // pred_region
      _
    $region5: #{mamba_hourly_forward.1} parent=1 // pred_fallthru
      _
    // Predicated region
    $region6: #{mamba_hourly_forward.1} parent=1 // pred_check
      _
    $region7: #{mamba_hourly_forward.1} parent=1 // pred_check_branch
      %22 = sbr.rel (0) target = $region9
    $region8: #{mamba_hourly_forward.1} parent=1 // pred_region
      _
    $region9: #{mamba_hourly_forward.1} parent=1 // pred_fallthru
      _
    // Predicated region
    $region10: #{mamba_hourly_forward.1} parent=1 // pred_check
      _
    $region11: #{mamba_hourly_forward.1} parent=1 // pred_check_branch
      %24 = sbr.rel (0) target = $region13
    $region12: #{mamba_hourly_forward.1} parent=1 // pred_region
      _
    $region13: #{mamba_hourly_forward.1} parent=1 // pred_fallthru
      _
    // Predicated region
    $region14: #{mamba_hourly_forward.1} parent=1 // pred_check
      _
    $region15: #{mamba_hourly_forward.1} parent=1 // pred_check_branch
      %26 = sbr.rel (0) target = $region17
    $region16: #{mamba_hourly_forward.1} parent=1 // pred_region
      _
    $region17: #{mamba_hourly_forward.1} parent=1 // pred_fallthru
      _
    // Predicated region
    $region18: #{mamba_hourly_forward.1} parent=1 // pred_check
      _
    $region19: #{mamba_hourly_forward.1} parent=1 // pred_check_branch
      %28 = sbr.rel (0) target = $region21
    $region20: #{mamba_hourly_forward.1} parent=1 // pred_region
      _
    $region21: #{mamba_hourly_forward.1} parent=1 // pred_fallthru
      _
    // Predicated region
    $region22: #{mamba_hourly_forward.1} parent=1 // pred_check
      _
    $region23: #{mamba_hourly_forward.1} parent=1 // pred_check_branch
      %30 = sbr.rel (0) target = $region25
    $region24: #{mamba_hourly_forward.1} parent=1 // pred_region
      _
    $region25: #{mamba_hourly_forward.1} parent=1 // pred_fallthru
      _
    // Predicated region
    $region26: #{mamba_hourly_forward.1} parent=1 // pred_check
      _
    $region27: #{mamba_hourly_forward.1} parent=1 // pred_check_branch
      %32 = sbr.rel (0) target = $region29
    $region28: #{mamba_hourly_forward.1} parent=1 // pred_region
      _
    $region29: #{mamba_hourly_forward.1} parent=1 // pred_fallthru
      _
    // Predicated region
    $region30: #{mamba_hourly_forward.1} parent=1 // pred_check
      _
    $region31: #{mamba_hourly_forward.1} parent=1 // pred_check_branch
      %34 = sbr.rel (0) target = $region33
    $region32: #{mamba_hourly_forward.1} parent=1 // pred_region
      _
    $region33: #{mamba_hourly_forward.1} parent=1 // pred_fallthru
      _
    // Predicated region
    $region34: #{mamba_hourly_forward.1} parent=1 // pred_check
      _
    $region35: #{mamba_hourly_forward.1} parent=1 // pred_check_branch
      %36 = sbr.rel (0) target = $region37
    $region36: #{mamba_hourly_forward.1} parent=1 // pred_region
      _
    $region37: #{mamba_hourly_forward.1} parent=1 // pred_fallthru
      _
    // Predicated region
    $region38: #{mamba_hourly_forward.1} parent=1 // pred_check
      _
    $region39: #{mamba_hourly_forward.1} parent=1 // pred_check_branch
      %38 = sbr.rel (0) target = $region41
    $region40: #{mamba_hourly_forward.1} parent=1 // pred_region
      _
    $region41: #{mamba_hourly_forward.1} parent=1 // pred_fallthru
      _
    // Predicated region
    $region42: #{mamba_hourly_forward.1} parent=1 // pred_check
      _
    $region43: #{mamba_hourly_forward.1} parent=1 // pred_check_branch
      %40 = sbr.rel (0) target = $region45
    $region44: #{mamba_hourly_forward.1} parent=1 // pred_region
      _
    $region45: #{mamba_hourly_forward.1} parent=1 // pred_fallthru
      _
    %v41 = vld [vmem:[%s0] sm:$0xff]
    %v42 = vld [vmem:[%s0 + $0x8] sm:$0xff]
    %v43 = vld [vmem:[%s0 + $0x10] sm:$0xff]
    %v44 = vld [vmem:[%s0 + $0x18] sm:$0xff]
    %v45 = vld [vmem:[%s0 + $0x20] sm:$0xff]
    %v46 = vld [vmem:[%s0 + $0x28] sm:$0xff]
    %v47 = vld [vmem:[%s1] sm:$0xff]
    %v48 = vld [vmem:[%s1 + $0x8] sm:$0x7f]
    %v49 = vld [vmem:[%s2] sm:$0x1]
    %v51 = vlaneseq
    %v52 = vshrl.u32 %v51, 7
    %v53 = vsub.s32 0, %v52
    %v54 = vrot.slane %v49, %v53
    %vm56 = vcmask 121856
    %v58 = vsel %vm56, %v41, 0
    %v61 = vsel %vm56, %v42, 0
    %v64 = vsel %vm56, %v43, 0
    %v67 = vsel %vm56, %v44, 0
    %v70 = vsel %vm56, %v45, 0
    %v73 = vsel %vm56, %v46, 0
    %vm75 = vcmask 1046528
    %v77 = vsel %vm75, %v48, 0
    %79 = vmatprep.subr.mxu0 0.0
    %80 = vmatpush1.msra.mxu0 %v47
    %81 = vmatprep.subr.mxu0 0.0
    %82 = vmatpush1.msra.mxu0 %v77
    %83 = vmatprep.subr.mxu0 0.0
    %84 = vmatpush1.msra.mxu0 0.0
    %85 = vmatprep.subr.mxu0 0.0
    %86 = vmatpush1.msra.mxu0 0.0
    %87 = vmatprep.subr.mxu0 0.0
    %88 = vmatpush1.msra.mxu0 0.0
    %89 = vmatprep.subr.mxu0 0.0
    %90 = vmatpush1.msra.mxu0 0.0
    %91 = vmatprep.subr.mxu0 0.0
    %92 = vmatpush1.msra.mxu0 0.0
    %93 = vmatprep.subr.mxu0 0.0
    %94 = vmatpush1.msra.mxu0 0.0
    %95 = vmatprep.subr.mxu0 0.0
    %96 = vmatpush1.msra.mxu0 0.0
    %97 = vmatprep.subr.mxu0 0.0
    %98 = vmatpush1.msra.mxu0 0.0
    %99 = vmatprep.subr.mxu0 0.0
    %100 = vmatpush1.msra.mxu0 0.0
    %101 = vmatprep.subr.mxu0 0.0
    %102 = vmatpush1.msra.mxu0 0.0
    %103 = vmatprep.subr.mxu0 0.0
    %104 = vmatpush1.msra.mxu0 0.0
    %105 = vmatprep.subr.mxu0 0.0
    %106 = vmatpush1.msra.mxu0 0.0
    %107 = vmatprep.subr.mxu0 0.0
    %108 = vmatpush1.msra.mxu0 0.0
    %109 = vmatprep.subr.mxu0 0.0
    %110 = vmatpush1.msra.mxu0 0.0
    %111 = vmatprep.subr.mxu0 0.0
    %112 = vmatpush1.msra.mxu0 0.0
    %113 = vmatprep.subr.mxu0 0.0
    %114 = vmatpush1.msra.mxu0 0.0
    %115 = vmatprep.subr.mxu0 0.0
    %116 = vmatpush1.msra.mxu0 0.0
    %117 = vmatprep.subr.mxu0 0.0
    %118 = vmatpush1.msra.mxu0 0.0
    %119 = vmatprep.subr.mxu0 0.0
    %120 = vmatpush1.msra.mxu0 0.0
    %121 = vmatprep.subr.mxu0 0.0
    %122 = vmatpush1.msra.mxu0 0.0
    %123 = vmatprep.subr.mxu0 0.0
    %124 = vmatpush1.msra.mxu0 0.0
    %125 = vmatprep.subr.mxu0 0.0
    %126 = vmatpush1.msra.mxu0 0.0
    %127 = vmatprep.subr.mxu0 0.0
    %128 = vmatpush1.msra.mxu0 0.0
    %129 = vmatprep.subr.mxu0 0.0
    %130 = vmatpush1.msra.mxu0 0.0
    %131 = vmatprep.subr.mxu0 0.0
    %132 = vmatpush1.msra.mxu0 0.0
    %133 = vmatprep.subr.mxu0 0.0
    %134 = vmatpush1.msra.mxu0 0.0
    %135 = vmatprep.subr.mxu0 0.0
    %136 = vmatpush1.msra.mxu0 0.0
    %137 = vmatprep.subr.mxu0 0.0
    %138 = vmatpush1.msra.mxu0 0.0
    %139 = vmatprep.subr.mxu0 0.0
    %140 = vmatpush1.msra.mxu0 0.0
    %141 = vmatprep.subr.mxu0 0.0
    %142 = vmatpush1.msra.mxu0 0.0
    %143 = vmatprep.mubr.f32.mxu0 0.0
    %144 = vmatmul.mubr.f32.gmra.mrb[0].mxu0 %v58
    %v145 = vpop.f32.mrb[0].mxu0
    %v146 = vadd.f32 %v54, %v145
    %v147 = vpop.f32.mrb[0].mxu0
    %148 = vmatprep.mubr.f32.mxu0 0.0
    %149 = vmatmul.mubr.f32.gmra.mrb[0].mxu0 %v61
    %v150 = vpop.f32.mrb[0].mxu0
    %v151 = vadd.f32 %v54, %v150
    %v152 = vpop.f32.mrb[0].mxu0
    %153 = vmatprep.mubr.f32.mxu0 0.0
    %154 = vmatmul.mubr.f32.gmra.mrb[0].mxu0 %v64
    %v155 = vpop.f32.mrb[0].mxu0
    %v156 = vadd.f32 %v54, %v155
    %v157 = vpop.f32.mrb[0].mxu0
    %158 = vmatprep.mubr.f32.mxu0 0.0
    %159 = vmatmul.mubr.f32.gmra.mrb[0].mxu0 %v67
    %v160 = vpop.f32.mrb[0].mxu0
    %v161 = vadd.f32 %v54, %v160
    %v162 = vpop.f32.mrb[0].mxu0
    %163 = vmatprep.mubr.f32.mxu0 0.0
    %164 = vmatmul.mubr.f32.gmra.mrb[0].mxu0 %v70
    %v165 = vpop.f32.mrb[0].mxu0
    %v166 = vadd.f32 %v54, %v165
    %v167 = vpop.f32.mrb[0].mxu0
    %168 = vmatprep.mubr.f32.mxu0 0.0
    %169 = vmatmul.mubr.f32.gmra.mrb[0].mxu0 %v73
    %v170 = vpop.f32.mrb[0].mxu0
    %v171 = vadd.f32 %v54, %v170
    %v172 = vpop.f32.mrb[0].mxu0
    %173 = vdwg.mxu0
    %v174 = vld [vmem:[%s3] sm:$0xf]
    %vm181 = vcmask 1045504
    %v182 = vrot.slane %v146, 2
    %v183 = vrot.slane %v151, 2
    %v184 = vsel %vm181, %v182, %v183
    %v185 = vrot.slane %v156, 2
    %v186 = vsel %vm181, %v183, %v185
    %v187 = vrot.slane %v161, 2
    %v188 = vsel %vm181, %v185, %v187
    %v189 = vrot.slane %v166, 2
    %v190 = vsel %vm181, %v187, %v189
    %v191 = vrot.slane %v171, 2
    %v192 = vsel %vm181, %v189, %v191
    %193 = vrot.lane.b32.xlu0 %v182, 112
    %v194 = vpop.permute.xlu0 %193
    %195 = vrot.lane.b32.xlu0 %v184, 112
    %v196 = vpop.permute.xlu0 %195
    %197 = vrot.lane.b32.xlu0 %v186, 112
    %v198 = vpop.permute.xlu0 %197
    %199 = vrot.lane.b32.xlu0 %v188, 112
    %v200 = vpop.permute.xlu0 %199
    %201 = vrot.lane.b32.xlu0 %v190, 112
    %v202 = vpop.permute.xlu0 %201
    %203 = vrot.lane.b32.xlu0 %v192, 112
    %v204 = vpop.permute.xlu0 %203
    %205 = vrot.lane.b32.xlu0 %v191, 112
    %v206 = vpop.permute.xlu0 %205
    %v214 = vsel %vm181, 0.0, %v194
    %v215 = vld [vmem:[%s4] sm:$0x1]
    %v216 = vlaneseq
    %v217 = vshrl.u32 %v216, 7
    %v218 = vsub.s32 0, %v217
    %v219 = vrot.slane %v174, %v218
    %v220 = vmul.f32 %v214, %v219
    %v221 = vmul.f32 %v196, %v219
    %v222 = vmul.f32 %v198, %v219
    %v223 = vmul.f32 %v200, %v219
    %v224 = vmul.f32 %v202, %v219
    %v225 = vmul.f32 %v204, %v219
    %v227 = vlaneseq
    %v228 = vshrl.u32 %v227, 7
    %v229 = vsub.s32 0, %v228
    %v230 = vrot.slane %v215, %v229
    %v232 = vadd.f32 %v230, %v220
    %v233 = vadd.f32 %v230, %v221
    %v234 = vadd.f32 %v230, %v222
    %v235 = vadd.f32 %v230, %v223
    %v236 = vadd.f32 %v230, %v224
    %v237 = vadd.f32 %v230, %v225
    %v238 = vlaneseq
    %v239 = vshrl.u32 %v238, 7
    %v240 = vsub.s32 1, %v239
    %v241 = vrot.slane %v174, %v240
    %v242 = vmul.f32 %v214, %v241
    %v243 = vmul.f32 %v196, %v241
    %v244 = vmul.f32 %v198, %v241
    %v245 = vmul.f32 %v200, %v241
    %v246 = vmul.f32 %v202, %v241
    %v247 = vmul.f32 %v204, %v241
    %v248 = vmul.f32 %v206, %v241
    %v256 = vrot.slane %v242, 2
    %v257 = vrot.slane %v243, 2
    %v258 = vsel %vm181, %v256, %v257
    %v259 = vrot.slane %v244, 2
    %v260 = vsel %vm181, %v257, %v259
    %v261 = vrot.slane %v245, 2
    %v262 = vsel %vm181, %v259, %v261
    %v263 = vrot.slane %v246, 2
    %v264 = vsel %vm181, %v261, %v263
    %v265 = vrot.slane %v247, 2
    %v266 = vsel %vm181, %v263, %v265
    %v267 = vrot.slane %v248, 2
    %v268 = vsel %vm181, %v265, %v267
    %v275 = vadd.f32 %v232, %v258
    %v276 = vadd.f32 %v233, %v260
    %v277 = vadd.f32 %v234, %v262
    %v278 = vadd.f32 %v235, %v264
    %v279 = vadd.f32 %v236, %v266
    %v280 = vadd.f32 %v237, %v268
    %v281 = vlaneseq
    %v282 = vshrl.u32 %v281, 7
    %v283 = vsub.s32 2, %v282
    %v284 = vrot.slane %v174, %v283
    %v285 = vmul.f32 %v214, %v284
    %v286 = vmul.f32 %v196, %v284
    %v287 = vmul.f32 %v198, %v284
    %v288 = vmul.f32 %v200, %v284
    %v289 = vmul.f32 %v202, %v284
    %v290 = vmul.f32 %v204, %v284
    %v291 = vmul.f32 %v206, %v284
    %vm299 = vcmask 1043456
    %v300 = vrot.slane %v285, 4
    %v301 = vrot.slane %v286, 4
    %v302 = vsel %vm299, %v300, %v301
    %v303 = vrot.slane %v287, 4
    %v304 = vsel %vm299, %v301, %v303
    %v305 = vrot.slane %v288, 4
    %v306 = vsel %vm299, %v303, %v305
    %v307 = vrot.slane %v289, 4
    %v308 = vsel %vm299, %v305, %v307
    %v309 = vrot.slane %v290, 4
    %v310 = vsel %vm299, %v307, %v309
    %v311 = vrot.slane %v291, 4
    %v312 = vsel %vm299, %v309, %v311
    %v319 = vadd.f32 %v275, %v302
    %v320 = vadd.f32 %v276, %v304
    %v321 = vadd.f32 %v277, %v306
    %v322 = vadd.f32 %v278, %v308
    %v323 = vadd.f32 %v279, %v310
    %v324 = vadd.f32 %v280, %v312
    %v325 = vlaneseq
    %v326 = vshrl.u32 %v325, 7
    %v327 = vsub.s32 3, %v326
    %v328 = vrot.slane %v174, %v327
    %v329 = vmul.f32 %v214, %v328
    %v330 = vmul.f32 %v196, %v328
    %v331 = vmul.f32 %v198, %v328
    %v332 = vmul.f32 %v200, %v328
    %v333 = vmul.f32 %v202, %v328
    %v334 = vmul.f32 %v204, %v328
    %v335 = vmul.f32 %v206, %v328
    %vm343 = vcmask 1041408
    %v344 = vrot.slane %v329, 6
    %v345 = vrot.slane %v330, 6
    %v346 = vsel %vm343, %v344, %v345
    %v347 = vrot.slane %v331, 6
    %v348 = vsel %vm343, %v345, %v347
    %v349 = vrot.slane %v332, 6
    %v350 = vsel %vm343, %v347, %v349
    %v351 = vrot.slane %v333, 6
    %v352 = vsel %vm343, %v349, %v351
    %v353 = vrot.slane %v334, 6
    %v354 = vsel %vm343, %v351, %v353
    %v355 = vrot.slane %v335, 6
    %v356 = vsel %vm343, %v353, %v355
    %v363 = vadd.f32 %v319, %v346
    %v364 = vadd.f32 %v320, %v348
    %v365 = vadd.f32 %v321, %v350
    %v366 = vadd.f32 %v322, %v352
    %v367 = vadd.f32 %v323, %v354
    %v368 = vadd.f32 %v324, %v356
    %v369 = vxor.u32 %v363, 2147483648
    %v370 = vxor.u32 %v364, 2147483648
    %v371 = vxor.u32 %v365, 2147483648
    %v372 = vxor.u32 %v366, 2147483648
    %v373 = vxor.u32 %v367, 2147483648
    %v374 = vxor.u32 %v368, 2147483648
    %v375 = vmul.f32 %v369, 1.442695
    %v376 = vpow.pop %v375
    %v377 = vmul.f32 %v370, 1.442695
    %v378 = vpow.pop %v377
    %v379 = vmul.f32 %v371, 1.442695
    %v380 = vpow.pop %v379
    %v381 = vmul.f32 %v372, 1.442695
    %v382 = vpow.pop %v381
    %v383 = vmul.f32 %v373, 1.442695
    %v384 = vpow.pop %v383
    %v385 = vmul.f32 %v374, 1.442695
    %v386 = vpow.pop %v385
    %v387 = vadd.f32 %v376, 1.0
    %v388 = vadd.f32 %v378, 1.0
    %v389 = vadd.f32 %v380, 1.0
    %v390 = vadd.f32 %v382, 1.0
    %v391 = vadd.f32 %v384, 1.0
    %v392 = vadd.f32 %v386, 1.0
    %v393 = vrcp.pop %v387
    %v394 = vmul.f32 1.0, %v393
    %v395 = vrcp.pop %v388
    %v396 = vmul.f32 1.0, %v395
    %v397 = vrcp.pop %v389
    %v398 = vmul.f32 1.0, %v397
    %v399 = vrcp.pop %v390
    %v400 = vmul.f32 1.0, %v399
    %v401 = vrcp.pop %v391
    %v402 = vmul.f32 1.0, %v401
    %v403 = vrcp.pop %v392
    %v404 = vmul.f32 1.0, %v403
    %v405 = vmul.f32 %v363, %v394
    %v406 = vmul.f32 %v364, %v396
    %v407 = vmul.f32 %v365, %v398
    %v408 = vmul.f32 %v366, %v400
    %v409 = vmul.f32 %v367, %v402
    %v410 = vmul.f32 %v368, %v404
    %v411 = vld [vmem:[%s5] sm:$0xff]
    %v412 = vld [vmem:[%s5 + $0x8] sm:$0xff]
    %v413 = vld [vmem:[%s5 + $0x10] sm:$0xff]
    %v414 = vld [vmem:[%s5 + $0x18] sm:$0xff]
    %vm415 = vcmask 130048
    %v417 = vsel %vm415, %v405, 0
    %v420 = vsel %vm415, %v406, 0
    %v423 = vsel %vm415, %v407, 0
    %v426 = vsel %vm415, %v408, 0
    %v429 = vsel %vm415, %v409, 0
    %v432 = vsel %vm415, %v410, 0
    %434 = vmatprep.subr.mxu0 %v412
    %435 = vmatpush1.msra.mxu0 %v411
    %436 = vmatprep.subr.mxu0 %v414
    %437 = vmatpush1.msra.mxu0 %v413
    %438 = vmatprep.subr.mxu0 0.0
    %439 = vmatpush1.msra.mxu0 0.0
    %440 = vmatprep.subr.mxu0 0.0
    %441 = vmatpush1.msra.mxu0 0.0
    %442 = vmatprep.subr.mxu0 0.0
    %443 = vmatpush1.msra.mxu0 0.0
    %444 = vmatprep.subr.mxu0 0.0
    %445 = vmatpush1.msra.mxu0 0.0
    %446 = vmatprep.subr.mxu0 0.0
    %447 = vmatpush1.msra.mxu0 0.0
    %448 = vmatprep.subr.mxu0 0.0
    %449 = vmatpush1.msra.mxu0 0.0
    %450 = vmatprep.subr.mxu0 0.0
    %451 = vmatpush1.msra.mxu0 0.0
    %452 = vmatprep.subr.mxu0 0.0
    %453 = vmatpush1.msra.mxu0 0.0
    %454 = vmatprep.subr.mxu0 0.0
    %455 = vmatpush1.msra.mxu0 0.0
    %456 = vmatprep.subr.mxu0 0.0
    %457 = vmatpush1.msra.mxu0 0.0
    %458 = vmatprep.subr.mxu0 0.0
    %459 = vmatpush1.msra.mxu0 0.0
    %460 = vmatprep.subr.mxu0 0.0
    %461 = vmatpush1.msra.mxu0 0.0
    %462 = vmatprep.subr.mxu0 0.0
    %463 = vmatpush1.msra.mxu0 0.0
    %464 = vmatprep.subr.mxu0 0.0
    %465 = vmatpush1.msra.mxu0 0.0
    %466 = vmatprep.subr.mxu0 0.0
    %467 = vmatpush1.msra.mxu0 0.0
    %468 = vmatprep.subr.mxu0 0.0
    %469 = vmatpush1.msra.mxu0 0.0
    %470 = vmatprep.subr.mxu0 0.0
    %471 = vmatpush1.msra.mxu0 0.0
    %472 = vmatprep.subr.mxu0 0.0
    %473 = vmatpush1.msra.mxu0 0.0
    %474 = vmatprep.subr.mxu0 0.0
    %475 = vmatpush1.msra.mxu0 0.0
    %476 = vmatprep.subr.mxu0 0.0
    %477 = vmatpush1.msra.mxu0 0.0
    %478 = vmatprep.subr.mxu0 0.0
    %479 = vmatpush1.msra.mxu0 0.0
    %480 = vmatprep.subr.mxu0 0.0
    %481 = vmatpush1.msra.mxu0 0.0
    %482 = vmatprep.subr.mxu0 0.0
    %483 = vmatpush1.msra.mxu0 0.0
    %484 = vmatprep.subr.mxu0 0.0
    %485 = vmatpush1.msra.mxu0 0.0
    %486 = vmatprep.subr.mxu0 0.0
    %487 = vmatpush1.msra.mxu0 0.0
    %488 = vmatprep.subr.mxu0 0.0
    %489 = vmatpush1.msra.mxu0 0.0
    %490 = vmatprep.subr.mxu0 0.0
    %491 = vmatpush1.msra.mxu0 0.0
    %492 = vmatprep.subr.mxu0 0.0
    %493 = vmatpush1.msra.mxu0 0.0
    %494 = vmatprep.subr.mxu0 0.0
    %495 = vmatpush1.msra.mxu0 0.0
    %496 = vmatprep.subr.mxu0 0.0
    %497 = vmatpush1.msra.mxu0 0.0
    %498 = vmatprep.mubr.f32.mxu0 0.0
    %499 = vmatmul.mubr.f32.gmra.mrb[0].mxu0 %v417
    %v500 = vpop.f32.mrb[0].mxu0
    %v501 = vadd.f32 0.0, %v500
    %v502 = vpop.f32.mrb[0].mxu0
    %v503 = vadd.f32 0.0, %v502
    %504 = vmatprep.mubr.f32.mxu0 0.0
    %505 = vmatmul.mubr.f32.gmra.mrb[0].mxu0 %v420
    %v506 = vpop.f32.mrb[0].mxu0
    %v507 = vadd.f32 0.0, %v506
    %v508 = vpop.f32.mrb[0].mxu0
    %v509 = vadd.f32 0.0, %v508
    %510 = vmatprep.mubr.f32.mxu0 0.0
    %511 = vmatmul.mubr.f32.gmra.mrb[0].mxu0 %v423
    %v512 = vpop.f32.mrb[0].mxu0
    %v513 = vadd.f32 0.0, %v512
    %v514 = vpop.f32.mrb[0].mxu0
    %v515 = vadd.f32 0.0, %v514
    %516 = vmatprep.mubr.f32.mxu0 0.0
    %517 = vmatmul.mubr.f32.gmra.mrb[0].mxu0 %v426
    %v518 = vpop.f32.mrb[0].mxu0
    %v519 = vadd.f32 0.0, %v518
    %v520 = vpop.f32.mrb[0].mxu0
    %v521 = vadd.f32 0.0, %v520
    %522 = vmatprep.mubr.f32.mxu0 0.0
    %523 = vmatmul.mubr.f32.gmra.mrb[0].mxu0 %v429
    %v524 = vpop.f32.mrb[0].mxu0
    %v525 = vadd.f32 0.0, %v524
    %v526 = vpop.f32.mrb[0].mxu0
    %v527 = vadd.f32 0.0, %v526
    %528 = vmatprep.mubr.f32.mxu0 0.0
    %529 = vmatmul.mubr.f32.gmra.mrb[0].mxu0 %v432
    %v530 = vpop.f32.mrb[0].mxu0
    %v531 = vadd.f32 0.0, %v530
    %v532 = vpop.f32.mrb[0].mxu0
    %v533 = vadd.f32 0.0, %v532
    %534 = vdwg.mxu0
    %v535 = vld [vmem:[%s6] sm:$0x1]
    %v537 = vlaneseq
    %v538 = vshrl.u32 %v537, 7
    %v539 = vsub.s32 0, %v538
    %v540 = vrot.slane %v535, %v539
    %v542 = vadd.f32 %v503, %v540
    %v543 = vadd.f32 %v509, %v540
    %v544 = vadd.f32 %v515, %v540
    %v545 = vadd.f32 %v521, %v540
    %v546 = vadd.f32 %v527, %v540
    %v547 = vadd.f32 %v533, %v540
    %v548 = vmax.f32 %v542, 0.0
    %v549 = vmax.f32 %v543, 0.0
    %v550 = vmax.f32 %v544, 0.0
    %v551 = vmax.f32 %v545, 0.0
    %v552 = vmax.f32 %v546, 0.0
    %v553 = vmax.f32 %v547, 0.0
    %vm554 = vcmp.ne.f32.partialorder %v542, %v542
    %vm555 = vcmp.ne.f32.partialorder %v543, %v543
    %vm556 = vcmp.ne.f32.partialorder %v544, %v544
    %vm557 = vcmp.ne.f32.partialorder %v545, %v545
    %vm558 = vcmp.ne.f32.partialorder %v546, %v546
    %vm559 = vcmp.ne.f32.partialorder %v547, %v547
    %v560 = vadd.f32 %v542, 0.0
    %v561 = vadd.f32 %v543, 0.0
    %v562 = vadd.f32 %v544, 0.0
    %v563 = vadd.f32 %v545, 0.0
    %v564 = vadd.f32 %v546, 0.0
    %v565 = vadd.f32 %v547, 0.0
    %v566 = vand.u32 2147483647, %v542
    %v567 = vand.u32 2147483647, %v543
    %v568 = vand.u32 2147483647, %v544
    %v569 = vand.u32 2147483647, %v545
    %v570 = vand.u32 2147483647, %v546
    %v571 = vand.u32 2147483647, %v547
    %v572 = vsub.f32 0.0, %v566
    %v573 = vsub.f32 0.0, %v567
    %v574 = vsub.f32 0.0, %v568
    %v575 = vsub.f32 0.0, %v569
    %v576 = vsub.f32 0.0, %v570
    %v577 = vsub.f32 0.0, %v571
    %v578 = vmul.f32 %v572, 1.442695
    %v579 = vpow.pop %v578
    %v580 = vmul.f32 %v573, 1.442695
    %v581 = vpow.pop %v580
    %v582 = vmul.f32 %v574, 1.442695
    %v583 = vpow.pop %v582
    %v584 = vmul.f32 %v575, 1.442695
    %v585 = vpow.pop %v584
    %v586 = vmul.f32 %v576, 1.442695
    %v587 = vpow.pop %v586
    %v588 = vmul.f32 %v577, 1.442695
    %v589 = vpow.pop %v588
    %v590 = vadd.f32 %v579, 1.0
    %v591 = vlog2.pop %v590
    %v592 = vmul.f32 %v591, 0.6931472
    %v593 = vmul.f32 -0.5, %v579
    %v594 = vadd.f32 %v593, 1.0
    %v595 = vmul.f32 %v594, %v579
    %v596 = vand.u32 2147483647, %v579
    %vm597 = vcmp.lt.f32.partialorder %v596, 0.0004427343
    %v598 = vsel %vm597, %v595, %v592
    %v599 = vadd.f32 %v581, 1.0
    %v600 = vlog2.pop %v599
    %v601 = vmul.f32 %v600, 0.6931472
    %v602 = vmul.f32 -0.5, %v581
    %v603 = vadd.f32 %v602, 1.0
    %v604 = vmul.f32 %v603, %v581
    %v605 = vand.u32 2147483647, %v581
    %vm606 = vcmp.lt.f32.partialorder %v605, 0.0004427343
    %v607 = vsel %vm606, %v604, %v601
    %v608 = vadd.f32 %v583, 1.0
    %v609 = vlog2.pop %v608
    %v610 = vmul.f32 %v609, 0.6931472
    %v611 = vmul.f32 -0.5, %v583
    %v612 = vadd.f32 %v611, 1.0
    %v613 = vmul.f32 %v612, %v583
    %v614 = vand.u32 2147483647, %v583
    %vm615 = vcmp.lt.f32.partialorder %v614, 0.0004427343
    %v616 = vsel %vm615, %v613, %v610
    %v617 = vadd.f32 %v585, 1.0
    %v618 = vlog2.pop %v617
    %v619 = vmul.f32 %v618, 0.6931472
    %v620 = vmul.f32 -0.5, %v585
    %v621 = vadd.f32 %v620, 1.0
    %v622 = vmul.f32 %v621, %v585
    %v623 = vand.u32 2147483647, %v585
    %vm624 = vcmp.lt.f32.partialorder %v623, 0.0004427343
    %v625 = vsel %vm624, %v622, %v619
    %v626 = vadd.f32 %v587, 1.0
    %v627 = vlog2.pop %v626
    %v628 = vmul.f32 %v627, 0.6931472
    %v629 = vmul.f32 -0.5, %v587
    %v630 = vadd.f32 %v629, 1.0
    %v631 = vmul.f32 %v630, %v587
    %v632 = vand.u32 2147483647, %v587
    %vm633 = vcmp.lt.f32.partialorder %v632, 0.0004427343
    %v634 = vsel %vm633, %v631, %v628
    %v635 = vadd.f32 %v589, 1.0
    %v636 = vlog2.pop %v635
    %v637 = vmul.f32 %v636, 0.6931472
    %v638 = vmul.f32 -0.5, %v589
    %v639 = vadd.f32 %v638, 1.0
    %v640 = vmul.f32 %v639, %v589
    %v641 = vand.u32 2147483647, %v589
    %vm642 = vcmp.lt.f32.partialorder %v641, 0.0004427343
    %v643 = vsel %vm642, %v640, %v637
    %v644 = vadd.f32 %v548, %v598
    %v645 = vadd.f32 %v549, %v607
    %v646 = vadd.f32 %v550, %v616
    %v647 = vadd.f32 %v551, %v625
    %v648 = vadd.f32 %v552, %v634
    %v649 = vadd.f32 %v553, %v643
    %v650 = vsel %vm554, %v560, %v644
    %v651 = vsel %vm555, %v561, %v645
    %v652 = vsel %vm556, %v562, %v646
    %v653 = vsel %vm557, %v563, %v647
    %v654 = vsel %vm558, %v564, %v648
    %v655 = vsel %vm559, %v565, %v649
    %v656 = vxor.u32 %v146, 2147483648
    %v657 = vxor.u32 %v151, 2147483648
    %v658 = vxor.u32 %v156, 2147483648
    %v659 = vxor.u32 %v161, 2147483648
    %v660 = vxor.u32 %v166, 2147483648
    %v661 = vxor.u32 %v171, 2147483648
    %v662 = vmul.f32 %v656, 1.442695
    %v663 = vpow.pop %v662
    %v664 = vmul.f32 %v657, 1.442695
    %v665 = vpow.pop %v664
    %v666 = vmul.f32 %v658, 1.442695
    %v667 = vpow.pop %v666
    %v668 = vmul.f32 %v659, 1.442695
    %v669 = vpow.pop %v668
    %v670 = vmul.f32 %v660, 1.442695
    %v671 = vpow.pop %v670
    %v672 = vmul.f32 %v661, 1.442695
    %v673 = vpow.pop %v672
    %v674 = vadd.f32 %v663, 1.0
    %v675 = vadd.f32 %v665, 1.0
    %v676 = vadd.f32 %v667, 1.0
    %v677 = vadd.f32 %v669, 1.0
    %v678 = vadd.f32 %v671, 1.0
    %v679 = vadd.f32 %v673, 1.0
    %v680 = vrcp.pop %v674
    %v681 = vmul.f32 1.0, %v680
    %v682 = vrcp.pop %v675
    %v683 = vmul.f32 1.0, %v682
    %v684 = vrcp.pop %v676
    %v685 = vmul.f32 1.0, %v684
    %v686 = vrcp.pop %v677
    %v687 = vmul.f32 1.0, %v686
    %v688 = vrcp.pop %v678
    %v689 = vmul.f32 1.0, %v688
    %v690 = vrcp.pop %v679
    %v691 = vmul.f32 1.0, %v690
    %v692 = vmul.f32 %v146, %v681
    %v693 = vmul.f32 %v151, %v683
    %v694 = vmul.f32 %v156, %v685
    %v695 = vmul.f32 %v161, %v687
    %v696 = vmul.f32 %v166, %v689
    %v697 = vmul.f32 %v171, %v691
    %v698 = vld [vmem:[%s9] sm:$0x1]
    %v700 = vlaneseq
    %v701 = vshrl.u32 %v700, 7
    %v702 = vsub.s32 0, %v701
    %v703 = vrot.slane %v698, %v702
    %v705 = vmul.f32 %v692, %v703
    %v706 = vmul.f32 %v693, %v703
    %v707 = vmul.f32 %v694, %v703
    %v708 = vmul.f32 %v695, %v703
    %v709 = vmul.f32 %v696, %v703
    %v710 = vmul.f32 %v697, %v703
    %v711 = vld [vmem:[%s8] sm:$0x1]
    %v713 = vlaneseq
    %v714 = vshrl.u32 %v713, 7
    %v715 = vsub.s32 0, %v714
    %v716 = vrot.slane %v711, %v715
    %v718 = vmul.f32 %v716, %v405
    %v719 = vmul.f32 %v716, %v406
    %v720 = vmul.f32 %v716, %v407
    %v721 = vmul.f32 %v716, %v408
    %v722 = vmul.f32 %v716, %v409
    %v723 = vmul.f32 %v716, %v410
    %v724 = vmul.f32 %v718, %v705
    %v725 = vmul.f32 %v719, %v706
    %v726 = vmul.f32 %v720, %v707
    %v727 = vmul.f32 %v721, %v708
    %v728 = vmul.f32 %v722, %v709
    %v729 = vmul.f32 %v723, %v710
    %v730 = vsel %vm415, %v724, 0.0
    %731 = vadd.xlane.f32.xlu0 %v730
    %v732 = vpop.xlane.xlu0 %731
    %v733 = vsel %vm415, %v725, 0.0
    %734 = vadd.xlane.f32.xlu0 %v733
    %v735 = vpop.xlane.xlu0 %734
    %v736 = vsel %vm415, %v726, 0.0
    %737 = vadd.xlane.f32.xlu0 %v736
    %v738 = vpop.xlane.xlu0 %737
    %v739 = vsel %vm415, %v727, 0.0
    %740 = vadd.xlane.f32.xlu0 %v739
    %v741 = vpop.xlane.xlu0 %740
    %v742 = vsel %vm415, %v728, 0.0
    %743 = vadd.xlane.f32.xlu0 %v742
    %v744 = vpop.xlane.xlu0 %743
    %v745 = vsel %vm415, %v729, 0.0
    %746 = vadd.xlane.f32.xlu0 %v745
    %v747 = vpop.xlane.xlu0 %746
    %v748 = vld [vmem:[#allocation5] sm:$0x1]
    %v750 = vlaneseq
    %v751 = vshrl.u32 %v750, 7
    %v752 = vsub.s32 0, %v751
    %v753 = vrot.slane %v748, %v752
    %v755 = vadd.f32 %v732, %v753
    %v756 = vadd.f32 %v735, %v753
    %v757 = vadd.f32 %v738, %v753
    %v758 = vadd.f32 %v741, %v753
    %v759 = vadd.f32 %v744, %v753
    %v760 = vadd.f32 %v747, %v753
    %767 = vrot.lane.b32.xlu0 %v650, 16
    %v768 = vpop.permute.xlu0 %767
    %769 = vrot.lane.b32.xlu0 %v651, 16
    %v770 = vpop.permute.xlu0 %769
    %771 = vrot.lane.b32.xlu0 %v652, 16
    %v772 = vpop.permute.xlu0 %771
    %773 = vrot.lane.b32.xlu0 %v653, 16
    %v774 = vpop.permute.xlu0 %773
    %775 = vrot.lane.b32.xlu0 %v654, 16
    %v776 = vpop.permute.xlu0 %775
    %777 = vrot.lane.b32.xlu0 %v655, 16
    %v778 = vpop.permute.xlu0 %777
    %785 = vrot.lane.b32.xlu0 %v650, 32
    %v786 = vpop.permute.xlu0 %785
    %787 = vrot.lane.b32.xlu0 %v651, 32
    %v788 = vpop.permute.xlu0 %787
    %789 = vrot.lane.b32.xlu0 %v652, 32
    %v790 = vpop.permute.xlu0 %789
    %791 = vrot.lane.b32.xlu0 %v653, 32
    %v792 = vpop.permute.xlu0 %791
    %793 = vrot.lane.b32.xlu0 %v654, 32
    %v794 = vpop.permute.xlu0 %793
    %795 = vrot.lane.b32.xlu0 %v655, 32
    %v796 = vpop.permute.xlu0 %795
    %803 = vrot.lane.b32.xlu0 %v650, 48
    %v804 = vpop.permute.xlu0 %803
    %805 = vrot.lane.b32.xlu0 %v651, 48
    %v806 = vpop.permute.xlu0 %805
    %807 = vrot.lane.b32.xlu0 %v652, 48
    %v808 = vpop.permute.xlu0 %807
    %809 = vrot.lane.b32.xlu0 %v653, 48
    %v810 = vpop.permute.xlu0 %809
    %811 = vrot.lane.b32.xlu0 %v654, 48
    %v812 = vpop.permute.xlu0 %811
    %813 = vrot.lane.b32.xlu0 %v655, 48
    %v814 = vpop.permute.xlu0 %813
    %v821 = vsel %vm415, %v650, %v768
    %v822 = vsel %vm415, %v651, %v770
    %v823 = vsel %vm415, %v652, %v772
    %v824 = vsel %vm415, %v653, %v774
    %v825 = vsel %vm415, %v654, %v776
    %v826 = vsel %vm415, %v655, %v778
    %vm827 = vcmask 261120
    %v828 = vsel %vm827, %v821, %v786
    %v829 = vsel %vm827, %v822, %v788
    %v830 = vsel %vm827, %v823, %v790
    %v831 = vsel %vm827, %v824, %v792
    %v832 = vsel %vm827, %v825, %v794
    %v833 = vsel %vm827, %v826, %v796
    %vm834 = vcmask 392192
    %v835 = vsel %vm834, %v828, %v804
    %v836 = vsel %vm834, %v829, %v806
    %v837 = vsel %vm834, %v830, %v808
    %v838 = vsel %vm834, %v831, %v810
    %v839 = vsel %vm834, %v832, %v812
    %v840 = vsel %vm834, %v833, %v814
    %v841 = vmul.f32 %v650, %v405
    %v842 = vmul.f32 %v651, %v406
    %v843 = vmul.f32 %v652, %v407
    %v844 = vmul.f32 %v653, %v408
    %v845 = vmul.f32 %v654, %v409
    %v846 = vmul.f32 %v655, %v410
    %853 = vrot.lane.b32.xlu0 %v841, 16
    %v854 = vpop.permute.xlu0 %853
    %855 = vrot.lane.b32.xlu0 %v842, 16
    %v856 = vpop.permute.xlu0 %855
    %857 = vrot.lane.b32.xlu0 %v843, 16
    %v858 = vpop.permute.xlu0 %857
    %859 = vrot.lane.b32.xlu0 %v844, 16
    %v860 = vpop.permute.xlu0 %859
    %861 = vrot.lane.b32.xlu0 %v845, 16
    %v862 = vpop.permute.xlu0 %861
    %863 = vrot.lane.b32.xlu0 %v846, 16
    %v864 = vpop.permute.xlu0 %863
    %871 = vrot.lane.b32.xlu0 %v841, 32
    %v872 = vpop.permute.xlu0 %871
    %873 = vrot.lane.b32.xlu0 %v842, 32
    %v874 = vpop.permute.xlu0 %873
    %875 = vrot.lane.b32.xlu0 %v843, 32
    %v876 = vpop.permute.xlu0 %875
    %877 = vrot.lane.b32.xlu0 %v844, 32
    %v878 = vpop.permute.xlu0 %877
    %879 = vrot.lane.b32.xlu0 %v845, 32
    %v880 = vpop.permute.xlu0 %879
    %881 = vrot.lane.b32.xlu0 %v846, 32
    %v882 = vpop.permute.xlu0 %881
    %889 = vrot.lane.b32.xlu0 %v841, 48
    %v890 = vpop.permute.xlu0 %889
    %891 = vrot.lane.b32.xlu0 %v842, 48
    %v892 = vpop.permute.xlu0 %891
    %893 = vrot.lane.b32.xlu0 %v843, 48
    %v894 = vpop.permute.xlu0 %893
    %895 = vrot.lane.b32.xlu0 %v844, 48
    %v896 = vpop.permute.xlu0 %895
    %897 = vrot.lane.b32.xlu0 %v845, 48
    %v898 = vpop.permute.xlu0 %897
    %899 = vrot.lane.b32.xlu0 %v846, 48
    %v900 = vpop.permute.xlu0 %899
    %v907 = vsel %vm415, %v841, %v854
    %v908 = vsel %vm415, %v842, %v856
    %v909 = vsel %vm415, %v843, %v858
    %v910 = vsel %vm415, %v844, %v860
    %v911 = vsel %vm415, %v845, %v862
    %v912 = vsel %vm415, %v846, %v864
    %v913 = vsel %vm827, %v907, %v872
    %v914 = vsel %vm827, %v908, %v874
    %v915 = vsel %vm827, %v909, %v876
    %v916 = vsel %vm827, %v910, %v878
    %v917 = vsel %vm827, %v911, %v880
    %v918 = vsel %vm827, %v912, %v882
    %v919 = vsel %vm834, %v913, %v890
    %v920 = vsel %vm834, %v914, %v892
    %v921 = vsel %vm834, %v915, %v894
    %v922 = vsel %vm834, %v916, %v896
    %v923 = vsel %vm834, %v917, %v898
    %v924 = vsel %vm834, %v918, %v900
    %931 = vrot.lane.b32.xlu0 %v705, 16
    %v932 = vpop.permute.xlu0 %931
    %933 = vrot.lane.b32.xlu0 %v706, 16
    %v934 = vpop.permute.xlu0 %933
    %935 = vrot.lane.b32.xlu0 %v707, 16
    %v936 = vpop.permute.xlu0 %935
    %937 = vrot.lane.b32.xlu0 %v708, 16
    %v938 = vpop.permute.xlu0 %937
    %939 = vrot.lane.b32.xlu0 %v709, 16
    %v940 = vpop.permute.xlu0 %939
    %941 = vrot.lane.b32.xlu0 %v710, 16
    %v942 = vpop.permute.xlu0 %941
    %949 = vrot.lane.b32.xlu0 %v705, 32
    %v950 = vpop.permute.xlu0 %949
    %951 = vrot.lane.b32.xlu0 %v706, 32
    %v952 = vpop.permute.xlu0 %951
    %953 = vrot.lane.b32.xlu0 %v707, 32
    %v954 = vpop.permute.xlu0 %953
    %955 = vrot.lane.b32.xlu0 %v708, 32
    %v956 = vpop.permute.xlu0 %955
    %957 = vrot.lane.b32.xlu0 %v709, 32
    %v958 = vpop.permute.xlu0 %957
    %959 = vrot.lane.b32.xlu0 %v710, 32
    %v960 = vpop.permute.xlu0 %959
    %967 = vrot.lane.b32.xlu0 %v705, 48
    %v968 = vpop.permute.xlu0 %967
    %969 = vrot.lane.b32.xlu0 %v706, 48
    %v970 = vpop.permute.xlu0 %969
    %971 = vrot.lane.b32.xlu0 %v707, 48
    %v972 = vpop.permute.xlu0 %971
    %973 = vrot.lane.b32.xlu0 %v708, 48
    %v974 = vpop.permute.xlu0 %973
    %975 = vrot.lane.b32.xlu0 %v709, 48
    %v976 = vpop.permute.xlu0 %975
    %977 = vrot.lane.b32.xlu0 %v710, 48
    %v978 = vpop.permute.xlu0 %977
    %v985 = vsel %vm415, %v705, %v932
    %v986 = vsel %vm415, %v706, %v934
    %v987 = vsel %vm415, %v707, %v936
    %v988 = vsel %vm415, %v708, %v938
    %v989 = vsel %vm415, %v709, %v940
    %v990 = vsel %vm415, %v710, %v942
    %v991 = vsel %vm827, %v985, %v950
    %v992 = vsel %vm827, %v986, %v952
    %v993 = vsel %vm827, %v987, %v954
    %v994 = vsel %vm827, %v988, %v956
    %v995 = vsel %vm827, %v989, %v958
    %v996 = vsel %vm827, %v990, %v960
    %v997 = vsel %vm834, %v991, %v968
    %v998 = vsel %vm834, %v992, %v970
    %v999 = vsel %vm834, %v993, %v972
    %v1000 = vsel %vm834, %v994, %v974
    %v1001 = vsel %vm834, %v995, %v976
    %v1002 = vsel %vm834, %v996, %v978
    %v1003 = vld [vmem:[%s7] sm:$0x1]
    %v1005 = vlaneseq
    %v1006 = vshrl.u32 %v1005, 7
    %v1007 = vsub.s32 0, %v1006
    %v1008 = vrot.slane %v1003, %v1007
    %v1010 = vmul.f32 %v1008, %v835
    %v1011 = vmul.f32 %v1008, %v836
    %v1012 = vmul.f32 %v1008, %v837
    %v1013 = vmul.f32 %v1008, %v838
    %v1014 = vmul.f32 %v1008, %v839
    %v1015 = vmul.f32 %v1008, %v840
    %v1016 = vmul.f32 %v1010, 1.442695
    %v1017 = vpow.pop %v1016
    %v1018 = vmul.f32 %v1011, 1.442695
    %v1019 = vpow.pop %v1018
    %v1020 = vmul.f32 %v1012, 1.442695
    %v1021 = vpow.pop %v1020
    %v1022 = vmul.f32 %v1013, 1.442695
    %v1023 = vpow.pop %v1022
    %v1024 = vmul.f32 %v1014, 1.442695
    %v1025 = vpow.pop %v1024
    %v1026 = vmul.f32 %v1015, 1.442695
    %v1027 = vpow.pop %v1026
    %v1028 = vmul.f32 %v501, %v919
    %v1029 = vmul.f32 %v507, %v920
    %v1030 = vmul.f32 %v513, %v921
    %v1031 = vmul.f32 %v519, %v922
    %v1032 = vmul.f32 %v525, %v923
    %v1033 = vmul.f32 %v531, %v924
    %1040 = vrot.lane.b32.xlu0 %v997, 64
    %v1041 = vpop.permute.xlu0 %1040
    %1042 = vrot.lane.b32.xlu0 %v998, 64
    %v1043 = vpop.permute.xlu0 %1042
    %1044 = vrot.lane.b32.xlu0 %v999, 64
    %v1045 = vpop.permute.xlu0 %1044
    %1046 = vrot.lane.b32.xlu0 %v1000, 64
    %v1047 = vpop.permute.xlu0 %1046
    %1048 = vrot.lane.b32.xlu0 %v1001, 64
    %v1049 = vpop.permute.xlu0 %1048
    %1050 = vrot.lane.b32.xlu0 %v1002, 64
    %v1051 = vpop.permute.xlu0 %1050
    %v1058 = vmul.f32 %v501, %v1041
    %v1059 = vmul.f32 %v507, %v1043
    %v1060 = vmul.f32 %v513, %v1045
    %v1061 = vmul.f32 %v519, %v1047
    %v1062 = vmul.f32 %v525, %v1049
    %v1063 = vmul.f32 %v531, %v1051
    %v1064 = vlaneseq
    %v1065 = vand.u32 %v1064, 127
    %vm1066 = vcmp.eq.s32.totalorder %v1065, 0
    %v1067 = vsel %vm1066, 1, 0
    %v1068 = vcvt.s32.f32 %v1067
    %vm1069 = vcmask 523264
    %v1070 = vsel %vm1069, %v1017, 0.0
    %v1071 = vsel %vm1069, %v1019, 0.0
    %v1072 = vsel %vm1069, %v1021, 0.0
    %v1073 = vsel %vm1069, %v1023, 0.0
    %v1074 = vsel %vm1069, %v1025, 0.0
    %v1075 = vsel %vm1069, %v1027, 0.0
    %1076 = vst [vmem:[#allocation2] sm:$0xff] %v1070
    %1077 = vst [vmem:[#allocation2 + $0x8] sm:$0xff] %v1071
    %1078 = vst [vmem:[#allocation2 + $0x10] sm:$0xff] %v1072
    %1079 = vst [vmem:[#allocation2 + $0x18] sm:$0xff] %v1073
    %1080 = vst [vmem:[#allocation2 + $0x20] sm:$0xff] %v1074
    %1081 = vst [vmem:[#allocation2 + $0x28] sm:$0xff] %v1075
    %1083 = vset.pattern.permute.xlu0 0
    %1084 = vperm.xlu0 %1083, %v755
    %v1085 = vpop.permute.xlu0 %1084
    %1088 = vset.pattern.permute.xlu0 0
    %1089 = vperm.xlu0 %1088, %v756
    %v1090 = vpop.permute.xlu0 %1089
    %1093 = vset.pattern.permute.xlu0 0
    %1094 = vperm.xlu0 %1093, %v757
    %v1095 = vpop.permute.xlu0 %1094
    %1098 = vset.pattern.permute.xlu0 0
    %1099 = vperm.xlu0 %1098, %v758
    %v1100 = vpop.permute.xlu0 %1099
    %1103 = vset.pattern.permute.xlu0 0
    %1104 = vperm.xlu0 %1103, %v759
    %v1105 = vpop.permute.xlu0 %1104
    %1108 = vset.pattern.permute.xlu0 0
    %1109 = vperm.xlu0 %1108, %v760
    %v1110 = vpop.permute.xlu0 %1109
    %v1112 = vmul.f32 %v1085, %v1068
    %v1113 = vmul.f32 %v1090, %v1068
    %v1114 = vmul.f32 %v1095, %v1068
    %v1115 = vmul.f32 %v1100, %v1068
    %v1116 = vmul.f32 %v1105, %v1068
    %v1117 = vmul.f32 %v1110, %v1068
    %1124 = vrot.lane.b32.xlu0 %v1112, 64
    %v1125 = vpop.permute.xlu0 %1124
    %1126 = vrot.lane.b32.xlu0 %v1113, 64
    %v1127 = vpop.permute.xlu0 %1126
    %1128 = vrot.lane.b32.xlu0 %v1114, 64
    %v1129 = vpop.permute.xlu0 %1128
    %1130 = vrot.lane.b32.xlu0 %v1115, 64
    %v1131 = vpop.permute.xlu0 %1130
    %1132 = vrot.lane.b32.xlu0 %v1116, 64
    %v1133 = vpop.permute.xlu0 %1132
    %1134 = vrot.lane.b32.xlu0 %v1117, 64
    %v1135 = vpop.permute.xlu0 %1134
    %v1142 = vsel %vm1069, %v1028, %v1125
    %v1143 = vsel %vm1069, %v1029, %v1127
    %v1144 = vsel %vm1069, %v1030, %v1129
    %v1145 = vsel %vm1069, %v1031, %v1131
    %v1146 = vsel %vm1069, %v1032, %v1133
    %v1147 = vsel %vm1069, %v1033, %v1135
    %1148 = vst [vmem:[#allocation3] sm:$0xff] %v1142
    %1149 = vst [vmem:[#allocation3 + $0x8] sm:$0xff] %v1143
    %1150 = vst [vmem:[#allocation3 + $0x10] sm:$0xff] %v1144
    %1151 = vst [vmem:[#allocation3 + $0x18] sm:$0xff] %v1145
    %1152 = vst [vmem:[#allocation3 + $0x20] sm:$0xff] %v1146
    %1153 = vst [vmem:[#allocation3 + $0x28] sm:$0xff] %v1147
    %v1154 = vadd.f32 %v1068, 0.0
    %1161 = vrot.lane.b32.xlu0 %v1058, 64
    %v1162 = vpop.permute.xlu0 %1161
    %1163 = vrot.lane.b32.xlu0 %v1059, 64
    %v1164 = vpop.permute.xlu0 %1163
    %1165 = vrot.lane.b32.xlu0 %v1060, 64
    %v1166 = vpop.permute.xlu0 %1165
    %1167 = vrot.lane.b32.xlu0 %v1061, 64
    %v1168 = vpop.permute.xlu0 %1167
    %1169 = vrot.lane.b32.xlu0 %v1062, 64
    %v1170 = vpop.permute.xlu0 %1169
    %1171 = vrot.lane.b32.xlu0 %v1063, 64
    %v1172 = vpop.permute.xlu0 %1171
    %1180 = vrot.lane.b32.xlu0 %v1154, 64
    %v1181 = vpop.permute.xlu0 %1180
    %v1183 = vsel %vm1069, %v1162, %v1181
    %v1184 = vsel %vm1069, %v1164, %v1181
    %v1185 = vsel %vm1069, %v1166, %v1181
    %v1186 = vsel %vm1069, %v1168, %v1181
    %v1187 = vsel %vm1069, %v1170, %v1181
    %v1188 = vsel %vm1069, %v1172, %v1181
    %1189 = vst [vmem:[#allocation4] sm:$0xff] %v1183
    %1190 = vst [vmem:[#allocation4 + $0x8] sm:$0xff] %v1184
    %1191 = vst [vmem:[#allocation4 + $0x10] sm:$0xff] %v1185
    %1192 = vst [vmem:[#allocation4 + $0x18] sm:$0xff] %v1186
    %1193 = vst [vmem:[#allocation4 + $0x20] sm:$0xff] %v1187
    %1194 = vst [vmem:[#allocation4 + $0x28] sm:$0xff] %v1188
    %v1195 = vld [vmem:[#allocation2] sm:$0x3]
    %v1196 = vld [vmem:[#allocation3] sm:$0x3]
    %v1197 = vld [vmem:[#allocation4] sm:$0x3]
    %v1198 = vmul.f32 %v1195, 0.0
    %v1199 = vadd.f32 %v1198, %v1196
    %v1200 = vmul.f32 %v1199, %v1197
    %v1201 = vsel %vm343, %v1200, 0.0
    %1202 = vadd.xlane.f32.xlu0 %v1201
    %v1203 = vpop.xlane.xlu0 %1202
    %v1204 = vmul.f32 %v1203, %v1068
    %v1205 = vadd.f32 %v1204, 0.0
    %v1206 = vld [vmem:[#allocation2 + $0x2] sm:$0x3]
    %v1207 = vld [vmem:[#allocation3 + $0x2] sm:$0x3]
    %v1208 = vld [vmem:[#allocation4 + $0x2] sm:$0x3]
    %v1209 = vmul.f32 %v1206, %v1199
    %v1210 = vadd.f32 %v1209, %v1207
    %v1211 = vmul.f32 %v1210, %v1208
    %v1212 = vsel %vm343, %v1211, 0.0
    %1213 = vadd.xlane.f32.xlu0 %v1212
    %v1214 = vpop.xlane.xlu0 %1213
    %vm1215 = vcmp.eq.s32.totalorder %v1065, 1
    %v1216 = vsel %vm1215, 1, 0
    %v1217 = vcvt.s32.f32 %v1216
    %v1218 = vmul.f32 %v1214, %v1217
    %v1219 = vadd.f32 %v1205, %v1218
    %v1220 = vld [vmem:[#allocation2 + $0x4] sm:$0x3]
    %v1221 = vld [vmem:[#allocation3 + $0x4] sm:$0x3]
    %v1222 = vld [vmem:[#allocation4 + $0x4] sm:$0x3]
    %v1223 = vmul.f32 %v1220, %v1210
    %v1224 = vadd.f32 %v1223, %v1221
    %v1225 = vmul.f32 %v1224, %v1222
    %v1226 = vsel %vm343, %v1225, 0.0
    %1227 = vadd.xlane.f32.xlu0 %v1226
    %v1228 = vpop.xlane.xlu0 %1227
    %vm1229 = vcmp.eq.s32.totalorder %v1065, 2
    %v1230 = vsel %vm1229, 1, 0
    %v1231 = vcvt.s32.f32 %v1230
    %v1232 = vmul.f32 %v1228, %v1231
    %v1233 = vadd.f32 %v1219, %v1232
    %v1234 = vld [vmem:[#allocation2 + $0x6] sm:$0x3]
    %v1235 = vld [vmem:[#allocation3 + $0x6] sm:$0x3]
    %v1236 = vld [vmem:[#allocation4 + $0x6] sm:$0x3]
    %v1237 = vmul.f32 %v1234, %v1224
    %v1238 = vadd.f32 %v1237, %v1235
    %v1239 = vmul.f32 %v1238, %v1236
    %v1240 = vsel %vm343, %v1239, 0.0
    %1241 = vadd.xlane.f32.xlu0 %v1240
    %v1242 = vpop.xlane.xlu0 %1241
    %vm1243 = vcmp.eq.s32.totalorder %v1065, 3
    %v1244 = vsel %vm1243, 1, 0
    %v1245 = vcvt.s32.f32 %v1244
    %v1246 = vmul.f32 %v1242, %v1245
    %v1247 = vadd.f32 %v1233, %v1246
    %v1248 = vld [vmem:[#allocation2 + $0x8] sm:$0x3]
    %v1249 = vld [vmem:[#allocation3 + $0x8] sm:$0x3]
    %v1250 = vld [vmem:[#allocation4 + $0x8] sm:$0x3]
    %v1251 = vmul.f32 %v1248, %v1238
    %v1252 = vadd.f32 %v1251, %v1249
    %v1253 = vmul.f32 %v1252, %v1250
    %v1254 = vsel %vm343, %v1253, 0.0
    %1255 = vadd.xlane.f32.xlu0 %v1254
    %v1256 = vpop.xlane.xlu0 %1255
    %vm1257 = vcmp.eq.s32.totalorder %v1065, 4
    %v1258 = vsel %vm1257, 1, 0
    %v1259 = vcvt.s32.f32 %v1258
    %v1260 = vmul.f32 %v1256, %v1259
    %v1261 = vadd.f32 %v1247, %v1260
    %v1262 = vld [vmem:[#allocation2 + $0xa] sm:$0x3]
    %v1263 = vld [vmem:[#allocation3 + $0xa] sm:$0x3]
    %v1264 = vld [vmem:[#allocation4 + $0xa] sm:$0x3]
    %v1265 = vmul.f32 %v1262, %v1252
    %v1266 = vadd.f32 %v1265, %v1263
    %v1267 = vmul.f32 %v1266, %v1264
    %v1268 = vsel %vm343, %v1267, 0.0
    %1269 = vadd.xlane.f32.xlu0 %v1268
    %v1270 = vpop.xlane.xlu0 %1269
    %vm1271 = vcmp.eq.s32.totalorder %v1065, 5
    %v1272 = vsel %vm1271, 1, 0
    %v1273 = vcvt.s32.f32 %v1272
    %v1274 = vmul.f32 %v1270, %v1273
    %v1275 = vadd.f32 %v1261, %v1274
    %v1276 = vld [vmem:[#allocation2 + $0xc] sm:$0x3]
    %v1277 = vld [vmem:[#allocation3 + $0xc] sm:$0x3]
    %v1278 = vld [vmem:[#allocation4 + $0xc] sm:$0x3]
    %v1279 = vmul.f32 %v1276, %v1266
    %v1280 = vadd.f32 %v1279, %v1277
    %v1281 = vmul.f32 %v1280, %v1278
    %v1282 = vsel %vm343, %v1281, 0.0
    %1283 = vadd.xlane.f32.xlu0 %v1282
    %v1284 = vpop.xlane.xlu0 %1283
    %vm1285 = vcmp.eq.s32.totalorder %v1065, 6
    %v1286 = vsel %vm1285, 1, 0
    %v1287 = vcvt.s32.f32 %v1286
    %v1288 = vmul.f32 %v1284, %v1287
    %v1289 = vadd.f32 %v1275, %v1288
    %v1290 = vld [vmem:[#allocation2 + $0xe] sm:$0x3]
    %v1291 = vld [vmem:[#allocation3 + $0xe] sm:$0x3]
    %v1292 = vld [vmem:[#allocation4 + $0xe] sm:$0x3]
    %v1293 = vmul.f32 %v1290, %v1280
    %v1294 = vadd.f32 %v1293, %v1291
    %v1295 = vmul.f32 %v1294, %v1292
    %v1296 = vsel %vm343, %v1295, 0.0
    %1297 = vadd.xlane.f32.xlu0 %v1296
    %v1298 = vpop.xlane.xlu0 %1297
    %vm1299 = vcmp.eq.s32.totalorder %v1065, 7
    %v1300 = vsel %vm1299, 1, 0
    %v1301 = vcvt.s32.f32 %v1300
    %v1302 = vmul.f32 %v1298, %v1301
    %v1303 = vadd.f32 %v1289, %v1302
    %v1304 = vld [vmem:[#allocation2 + $0x10] sm:$0x3]
    %v1305 = vld [vmem:[#allocation3 + $0x10] sm:$0x3]
    %v1306 = vld [vmem:[#allocation4 + $0x10] sm:$0x3]
    %v1307 = vmul.f32 %v1304, %v1294
    %v1308 = vadd.f32 %v1307, %v1305
    %v1309 = vmul.f32 %v1308, %v1306
    %v1310 = vsel %vm343, %v1309, 0.0
    %1311 = vadd.xlane.f32.xlu0 %v1310
    %v1312 = vpop.xlane.xlu0 %1311
    %vm1313 = vcmp.eq.s32.totalorder %v1065, 8
    %v1314 = vsel %vm1313, 1, 0
    %v1315 = vcvt.s32.f32 %v1314
    %v1316 = vmul.f32 %v1312, %v1315
    %v1317 = vadd.f32 %v1303, %v1316
    %v1318 = vld [vmem:[#allocation2 + $0x12] sm:$0x3]
    %v1319 = vld [vmem:[#allocation3 + $0x12] sm:$0x3]
    %v1320 = vld [vmem:[#allocation4 + $0x12] sm:$0x3]
    %v1321 = vmul.f32 %v1318, %v1308
    %v1322 = vadd.f32 %v1321, %v1319
    %v1323 = vmul.f32 %v1322, %v1320
    %v1324 = vsel %vm343, %v1323, 0.0
    %1325 = vadd.xlane.f32.xlu0 %v1324
    %v1326 = vpop.xlane.xlu0 %1325
    %vm1327 = vcmp.eq.s32.totalorder %v1065, 9
    %v1328 = vsel %vm1327, 1, 0
    %v1329 = vcvt.s32.f32 %v1328
    %v1330 = vmul.f32 %v1326, %v1329
    %v1331 = vadd.f32 %v1317, %v1330
    %v1332 = vld [vmem:[#allocation2 + $0x14] sm:$0x3]
    %v1333 = vld [vmem:[#allocation3 + $0x14] sm:$0x3]
    %v1334 = vld [vmem:[#allocation4 + $0x14] sm:$0x3]
    %v1335 = vmul.f32 %v1332, %v1322
    %v1336 = vadd.f32 %v1335, %v1333
    %v1337 = vmul.f32 %v1336, %v1334
    %v1338 = vsel %vm343, %v1337, 0.0
    %1339 = vadd.xlane.f32.xlu0 %v1338
    %v1340 = vpop.xlane.xlu0 %1339
    %vm1341 = vcmp.eq.s32.totalorder %v1065, 10
    %v1342 = vsel %vm1341, 1, 0
    %v1343 = vcvt.s32.f32 %v1342
    %v1344 = vmul.f32 %v1340, %v1343
    %v1345 = vadd.f32 %v1331, %v1344
    %v1346 = vld [vmem:[#allocation2 + $0x16] sm:$0x3]
    %v1347 = vld [vmem:[#allocation3 + $0x16] sm:$0x3]
    %v1348 = vld [vmem:[#allocation4 + $0x16] sm:$0x3]
    %v1349 = vmul.f32 %v1346, %v1336
    %v1350 = vadd.f32 %v1349, %v1347
    %v1351 = vmul.f32 %v1350, %v1348
    %v1352 = vsel %vm343, %v1351, 0.0
    %1353 = vadd.xlane.f32.xlu0 %v1352
    %v1354 = vpop.xlane.xlu0 %1353
    %vm1355 = vcmp.eq.s32.totalorder %v1065, 11
    %v1356 = vsel %vm1355, 1, 0
    %v1357 = vcvt.s32.f32 %v1356
    %v1358 = vmul.f32 %v1354, %v1357
    %v1359 = vadd.f32 %v1345, %v1358
    %v1360 = vld [vmem:[#allocation2 + $0x18] sm:$0x3]
    %v1361 = vld [vmem:[#allocation3 + $0x18] sm:$0x3]
    %v1362 = vld [vmem:[#allocation4 + $0x18] sm:$0x3]
    %v1363 = vmul.f32 %v1360, %v1350
    %v1364 = vadd.f32 %v1363, %v1361
    %v1365 = vmul.f32 %v1364, %v1362
    %v1366 = vsel %vm343, %v1365, 0.0
    %1367 = vadd.xlane.f32.xlu0 %v1366
    %v1368 = vpop.xlane.xlu0 %1367
    %vm1369 = vcmp.eq.s32.totalorder %v1065, 12
    %v1370 = vsel %vm1369, 1, 0
    %v1371 = vcvt.s32.f32 %v1370
    %v1372 = vmul.f32 %v1368, %v1371
    %v1373 = vadd.f32 %v1359, %v1372
    %v1374 = vld [vmem:[#allocation2 + $0x1a] sm:$0x3]
    %v1375 = vld [vmem:[#allocation3 + $0x1a] sm:$0x3]
    %v1376 = vld [vmem:[#allocation4 + $0x1a] sm:$0x3]
    %v1377 = vmul.f32 %v1374, %v1364
    %v1378 = vadd.f32 %v1377, %v1375
    %v1379 = vmul.f32 %v1378, %v1376
    %v1380 = vsel %vm343, %v1379, 0.0
    %1381 = vadd.xlane.f32.xlu0 %v1380
    %v1382 = vpop.xlane.xlu0 %1381
    %vm1383 = vcmp.eq.s32.totalorder %v1065, 13
    %v1384 = vsel %vm1383, 1, 0
    %v1385 = vcvt.s32.f32 %v1384
    %v1386 = vmul.f32 %v1382, %v1385
    %v1387 = vadd.f32 %v1373, %v1386
    %v1388 = vld [vmem:[#allocation2 + $0x1c] sm:$0x3]
    %v1389 = vld [vmem:[#allocation3 + $0x1c] sm:$0x3]
    %v1390 = vld [vmem:[#allocation4 + $0x1c] sm:$0x3]
    %v1391 = vmul.f32 %v1388, %v1378
    %v1392 = vadd.f32 %v1391, %v1389
    %v1393 = vmul.f32 %v1392, %v1390
    %v1394 = vsel %vm343, %v1393, 0.0
    %1395 = vadd.xlane.f32.xlu0 %v1394
    %v1396 = vpop.xlane.xlu0 %1395
    %vm1397 = vcmp.eq.s32.totalorder %v1065, 14
    %v1398 = vsel %vm1397, 1, 0
    %v1399 = vcvt.s32.f32 %v1398
    %v1400 = vmul.f32 %v1396, %v1399
    %v1401 = vadd.f32 %v1387, %v1400
    %v1402 = vld [vmem:[#allocation2 + $0x1e] sm:$0x3]
    %v1403 = vld [vmem:[#allocation3 + $0x1e] sm:$0x3]
    %v1404 = vld [vmem:[#allocation4 + $0x1e] sm:$0x3]
    %v1405 = vmul.f32 %v1402, %v1392
    %v1406 = vadd.f32 %v1405, %v1403
    %v1407 = vmul.f32 %v1406, %v1404
    %v1408 = vsel %vm343, %v1407, 0.0
    %1409 = vadd.xlane.f32.xlu0 %v1408
    %v1410 = vpop.xlane.xlu0 %1409
    %vm1411 = vcmp.eq.s32.totalorder %v1065, 15
    %v1412 = vsel %vm1411, 1, 0
    %v1413 = vcvt.s32.f32 %v1412
    %v1414 = vmul.f32 %v1410, %v1413
    %v1415 = vadd.f32 %v1401, %v1414
    %v1416 = vld [vmem:[#allocation2 + $0x20] sm:$0x3]
    %v1417 = vld [vmem:[#allocation3 + $0x20] sm:$0x3]
    %v1418 = vld [vmem:[#allocation4 + $0x20] sm:$0x3]
    %v1419 = vmul.f32 %v1416, %v1406
    %v1420 = vadd.f32 %v1419, %v1417
    %v1421 = vmul.f32 %v1420, %v1418
    %v1422 = vsel %vm343, %v1421, 0.0
    %1423 = vadd.xlane.f32.xlu0 %v1422
    %v1424 = vpop.xlane.xlu0 %1423
    %vm1425 = vcmp.eq.s32.totalorder %v1065, 16
    %v1426 = vsel %vm1425, 1, 0
    %v1427 = vcvt.s32.f32 %v1426
    %v1428 = vmul.f32 %v1424, %v1427
    %v1429 = vadd.f32 %v1415, %v1428
    %v1430 = vld [vmem:[#allocation2 + $0x22] sm:$0x3]
    %v1431 = vld [vmem:[#allocation3 + $0x22] sm:$0x3]
    %v1432 = vld [vmem:[#allocation4 + $0x22] sm:$0x3]
    %v1433 = vmul.f32 %v1430, %v1420
    %v1434 = vadd.f32 %v1433, %v1431
    %v1435 = vmul.f32 %v1434, %v1432
    %v1436 = vsel %vm343, %v1435, 0.0
    %1437 = vadd.xlane.f32.xlu0 %v1436
    %v1438 = vpop.xlane.xlu0 %1437
    %vm1439 = vcmp.eq.s32.totalorder %v1065, 17
    %v1440 = vsel %vm1439, 1, 0
    %v1441 = vcvt.s32.f32 %v1440
    %v1442 = vmul.f32 %v1438, %v1441
    %v1443 = vadd.f32 %v1429, %v1442
    %v1444 = vld [vmem:[#allocation2 + $0x24] sm:$0x3]
    %v1445 = vld [vmem:[#allocation3 + $0x24] sm:$0x3]
    %v1446 = vld [vmem:[#allocation4 + $0x24] sm:$0x3]
    %v1447 = vmul.f32 %v1444, %v1434
    %v1448 = vadd.f32 %v1447, %v1445
    %v1449 = vmul.f32 %v1448, %v1446
    %v1450 = vsel %vm343, %v1449, 0.0
    %1451 = vadd.xlane.f32.xlu0 %v1450
    %v1452 = vpop.xlane.xlu0 %1451
    %vm1453 = vcmp.eq.s32.totalorder %v1065, 18
    %v1454 = vsel %vm1453, 1, 0
    %v1455 = vcvt.s32.f32 %v1454
    %v1456 = vmul.f32 %v1452, %v1455
    %v1457 = vadd.f32 %v1443, %v1456
    %v1458 = vld [vmem:[#allocation2 + $0x26] sm:$0x3]
    %v1459 = vld [vmem:[#allocation3 + $0x26] sm:$0x3]
    %v1460 = vld [vmem:[#allocation4 + $0x26] sm:$0x3]
    %v1461 = vmul.f32 %v1458, %v1448
    %v1462 = vadd.f32 %v1461, %v1459
    %v1463 = vmul.f32 %v1462, %v1460
    %v1464 = vsel %vm343, %v1463, 0.0
    %1465 = vadd.xlane.f32.xlu0 %v1464
    %v1466 = vpop.xlane.xlu0 %1465
    %vm1467 = vcmp.eq.s32.totalorder %v1065, 19
    %v1468 = vsel %vm1467, 1, 0
    %v1469 = vcvt.s32.f32 %v1468
    %v1470 = vmul.f32 %v1466, %v1469
    %v1471 = vadd.f32 %v1457, %v1470
    %v1472 = vld [vmem:[#allocation2 + $0x28] sm:$0x3]
    %v1473 = vld [vmem:[#allocation3 + $0x28] sm:$0x3]
    %v1474 = vld [vmem:[#allocation4 + $0x28] sm:$0x3]
    %v1475 = vmul.f32 %v1472, %v1462
    %v1476 = vadd.f32 %v1475, %v1473
    %v1477 = vmul.f32 %v1476, %v1474
    %v1478 = vsel %vm343, %v1477, 0.0
    %1479 = vadd.xlane.f32.xlu0 %v1478
    %v1480 = vpop.xlane.xlu0 %1479
    %vm1481 = vcmp.eq.s32.totalorder %v1065, 20
    %v1482 = vsel %vm1481, 1, 0
    %v1483 = vcvt.s32.f32 %v1482
    %v1484 = vmul.f32 %v1480, %v1483
    %v1485 = vadd.f32 %v1471, %v1484
    %v1486 = vld [vmem:[#allocation2 + $0x2a] sm:$0x3]
    %v1487 = vld [vmem:[#allocation3 + $0x2a] sm:$0x3]
    %v1488 = vld [vmem:[#allocation4 + $0x2a] sm:$0x3]
    %v1489 = vmul.f32 %v1486, %v1476
    %v1490 = vadd.f32 %v1489, %v1487
    %v1491 = vmul.f32 %v1490, %v1488
    %v1492 = vsel %vm343, %v1491, 0.0
    %1493 = vadd.xlane.f32.xlu0 %v1492
    %v1494 = vpop.xlane.xlu0 %1493
    %vm1495 = vcmp.eq.s32.totalorder %v1065, 21
    %v1496 = vsel %vm1495, 1, 0
    %v1497 = vcvt.s32.f32 %v1496
    %v1498 = vmul.f32 %v1494, %v1497
    %v1499 = vadd.f32 %v1485, %v1498
    %v1500 = vld [vmem:[#allocation2 + $0x2c] sm:$0x3]
    %v1501 = vld [vmem:[#allocation3 + $0x2c] sm:$0x3]
    %v1502 = vld [vmem:[#allocation4 + $0x2c] sm:$0x3]
    %v1503 = vmul.f32 %v1500, %v1490
    %v1504 = vadd.f32 %v1503, %v1501
    %v1505 = vmul.f32 %v1504, %v1502
    %v1506 = vsel %vm343, %v1505, 0.0
    %1507 = vadd.xlane.f32.xlu0 %v1506
    %v1508 = vpop.xlane.xlu0 %1507
    %vm1509 = vcmp.eq.s32.totalorder %v1065, 22
    %v1510 = vsel %vm1509, 1, 0
    %v1511 = vcvt.s32.f32 %v1510
    %v1512 = vmul.f32 %v1508, %v1511
    %v1513 = vadd.f32 %v1499, %v1512
    %v1514 = vld [vmem:[#allocation2 + $0x2e] sm:$0x3]
    %v1515 = vld [vmem:[#allocation3 + $0x2e] sm:$0x3]
    %v1516 = vld [vmem:[#allocation4 + $0x2e] sm:$0x3]
    %v1517 = vmul.f32 %v1514, %v1504
    %v1518 = vadd.f32 %v1517, %v1515
    %v1519 = vmul.f32 %v1518, %v1516
    %v1520 = vsel %vm343, %v1519, 0.0
    %1521 = vadd.xlane.f32.xlu0 %v1520
    %v1522 = vpop.xlane.xlu0 %1521
    %vm1523 = vcmp.eq.s32.totalorder %v1065, 23
    %v1524 = vsel %vm1523, 1, 0
    %v1525 = vcvt.s32.f32 %v1524
    %v1526 = vmul.f32 %v1522, %v1525
    %v1527 = vadd.f32 %v1513, %v1526
    %vm1528 = vcmask 189440
    %1529 = vst.msk [vmem:[#allocation6] sm:$0x3] %vm1528, %v1527
    // Predicated region
    $region46: #{mamba_hourly_forward.1} parent=1 // pred_check
      _
    $region47: #{mamba_hourly_forward.1} parent=1 // pred_check_branch
      %1531 = sbr.rel (0) target = $region49
    $region48: #{mamba_hourly_forward.1} parent=1 // pred_region
      %s1533 = ssub.s32 32, 32
      %1534 = vsyncadd [#allocation7], %s1533
      %s1536 = sshll.u32 [#allocation6], 4
      %s1537 = int_to_ptr.vmem [resolvable:$true] %s1536
      %1539 = dma.vmem_to_hbm [thread:$0]  %s1537, 32, %s11, [#allocation7]
    $region49: #{mamba_hourly_forward.1} parent=1 // pred_fallthru
      _
    // Predicated region
    $region50: #{mamba_hourly_forward.1} parent=1 // pred_check
      _
    $region51: #{mamba_hourly_forward.1} parent=1 // pred_check_branch
      %1541 = sbr.rel (0) target = $region53
    $region52: #{mamba_hourly_forward.1} parent=1 // pred_region
      %1542 = dma.done [#allocation7], 32
    $region53: #{mamba_hourly_forward.1} parent=1 // pred_fallthru
      _
    %1543 = vsyncpa [#allocation7], 1

</llo_original>
